<compile_context>
chip_gen: v7x
topology: tpu7x:2x2x1
jax: 0.10.0
libtpu: 0.0.40
codegen_flags: <defaults>
</compile_context>

<pallas_src>
import functools

import jax
import jax.numpy as jnp
from jax.experimental import pallas as pl
from jax.experimental.pallas import tpu as pltpu


# ---------------------------------------------------------------------------
# Fused ASM kernel: one batch element per grid step.
# Layout inside the kernel: channels on sublanes, pixels (H*W) on lanes.
# ---------------------------------------------------------------------------
def _asm_kernel(lc_ref, fuse_ref, gc_ref, pw_ref, pb_ref, sel_ref,
                ww_ref, wb_ref, w1t_ref, w2t_ref, out_ref, *, I):
    lcv = lc_ref[0]                                   # [C_lc, N]
    x = fuse_ref[0]                                   # [C,    N]
    gcv = gc_ref[0]                                   # [C_gc, N]

    C, N = x.shape

    # ---- fused theta / phi / g 1x1 convs: one [3I,C] @ [C,N] matmul -------
    proj = jnp.dot(pw_ref[...], x,
                   preferred_element_type=jnp.float32) + pb_ref[...]  # [3I, N]
    theta = proj[:I, :]                               # [I,  N]
    pg = proj[I:, :]                                  # [2I, N]  (phi ; g)

    # ---- 2x2 max-pool of phi/g via 4 precomputed one-hot gather matmuls ---
    # sel_ref[o] is [N, N2]; column q is one-hot at flat pixel base(q)+off(o).
    p0 = jnp.dot(pg, sel_ref[0], preferred_element_type=jnp.float32)  # [2I, N2]
    p1 = jnp.dot(pg, sel_ref[1], preferred_element_type=jnp.float32)
    p2 = jnp.dot(pg, sel_ref[2], preferred_element_type=jnp.float32)
    p3 = jnp.dot(pg, sel_ref[3], preferred_element_type=jnp.float32)
    pg_pool = jnp.maximum(jnp.maximum(p0, p1), jnp.maximum(p2, p3))   # [2I, N2]
    phi_p = pg_pool[:I, :]                            # [I, N2]
    g_p = pg_pool[I:, :]                              # [I, N2]

    # ---- non-local attention (f kept transposed: pooled dim on sublanes) --
    f_t = jnp.dot(phi_p.T, theta,
                  preferred_element_type=jnp.float32)                # [N2, N]
    mx = jnp.max(f_t, axis=0, keepdims=True)                         # [1,  N]
    e = jnp.exp(f_t - mx)
    s = jnp.sum(e, axis=0, keepdims=True)                            # [1,  N]
    attn_t = e * pl.reciprocal(s, approx=True)                       # [N2, N]
    y = jnp.dot(g_p, attn_t, preferred_element_type=jnp.float32)     # [I,  N]

    # ---- W 1x1 conv (eval-mode BN folded into weights) + residual ---------
    z = (jnp.dot(ww_ref[...], y, preferred_element_type=jnp.float32)
         + wb_ref[...] + x)                                          # [C, N]

    # ---- SELayer on concat([lc, z, gc]); concat lives only in vregs/VMEM --
    cat = jnp.concatenate([lcv, z, gcv], axis=0)                     # [Call, N]
    mvec = jnp.sum(cat, axis=1, keepdims=True) * (1.0 / N)           # [Call, 1]
    # tiny SE MLP as broadcast-multiply + reduces (no awkward N=1 matmuls)
    h = jnp.maximum(jnp.sum(w1t_ref[...] * mvec, axis=0, keepdims=True),
                    0.0)                                             # [1, r]
    gate = jax.nn.sigmoid(jnp.sum(w2t_ref[...] * h, axis=1,
                                  keepdims=True))                    # [Call, 1]
    out_ref[0] = cat * gate                                          # [Call, N]


# ---------------------------------------------------------------------------
# Wrapper: ASM forward on NCHW inputs.
# ---------------------------------------------------------------------------
def asm_forward(lc, fuse, gc, params):
    B, C, H, W = fuse.shape
    C_lc, C_gc = lc.shape[1], gc.shape[1]
    N = H * W
    I = params["theta_w"].shape[0]
    Call = C_lc + C + C_gc
    W2 = W // 2
    N2 = N // 4

    # NCHW -> [B, C, H*W]: pure reshape, no transpose.
    lc_f = lc.reshape(B, C_lc, N)
    fuse_f = fuse.reshape(B, C, N)
    gc_f = gc.reshape(B, C_gc, N)

    # Fold parameters into kernel-friendly layouts (tiny, done once by XLA).
    proj_w = jnp.concatenate([params["theta_w"], params["phi_w"],
                              params["g_w"]], axis=0)                # [3I, C]
    proj_b = jnp.concatenate([params["theta_b"], params["phi_b"],
                              params["g_b"]], axis=0).reshape(3 * I, 1)
    bns = params["bn_scale"].reshape(C, 1)
    bnb = params["bn_shift"].reshape(C, 1)
    ww_f = params["W_w"] * bns                                       # [C, I]
    wb_f = params["W_b"].reshape(C, 1) * bns + bnb                   # [C, 1]
    se_w1t = params["se_w1"]                                         # [Call, r]
    se_w2t = params["se_w2"].T                                       # [Call, r]
    r = se_w1t.shape[1]

    # Precomputed one-hot gather matrices for the 2x2 max-pool: pooled index
    # q = h2*W2 + w2 gathers flat pixels base, base+1, base+W, base+W+1 with
    # base = (2*h2)*W + 2*w2.  Built once here; DMA'd once (const block idx).
    q = jnp.arange(N2, dtype=jnp.int32)
    base = 2 * (q % W2) + (2 * W) * (q // W2)                        # [N2]
    offs = jnp.array([0, 1, W, W + 1], dtype=jnp.int32)
    tgt = base[None, :] + offs[:, None]                              # [4, N2]
    sel = (jnp.arange(N, dtype=jnp.int32)[None, :, None]
           == tgt[:, None, :]).astype(jnp.float32)                   # [4, N, N2]

    flops_per_b = (2 * (3 * I) * C * N            # fused projection
                   + 4 * 2 * (2 * I) * N * N2     # pooling gather matmuls
                   + 2 * N2 * I * N               # f
                   + 2 * I * N2 * N               # y
                   + 2 * C * I * N                # W conv
                   + 15 * Call * N)               # elementwise epilogue
    cost = pl.CostEstimate(
        flops=B * flops_per_b,
        transcendentals=B * (N2 * N + Call),
        bytes_accessed=(4 * B * N * (C_lc + C + C_gc + Call)
                        + 4 * 4 * N * N2 + 4096),
    )

    kernel = functools.partial(_asm_kernel, I=I)
    const2 = lambda b: (0, 0)
    const3 = lambda b: (0, 0, 0)

    out_flat = pl.pallas_call(
        kernel,
        out_shape=jax.ShapeDtypeStruct((B, Call, N), jnp.float32),
        grid=(B,),
        in_specs=[
            pl.BlockSpec((1, C_lc, N), lambda b: (b, 0, 0)),
            pl.BlockSpec((1, C, N), lambda b: (b, 0, 0)),
            pl.BlockSpec((1, C_gc, N), lambda b: (b, 0, 0)),
            pl.BlockSpec((3 * I, C), const2),
            pl.BlockSpec((3 * I, 1), const2),
            pl.BlockSpec((4, N, N2), const3),
            pl.BlockSpec((C, I), const2),
            pl.BlockSpec((C, 1), const2),
            pl.BlockSpec((Call, r), const2),
            pl.BlockSpec((Call, r), const2),
        ],
        out_specs=pl.BlockSpec((1, Call, N), lambda b: (b, 0, 0)),
        compiler_params=pltpu.CompilerParams(
            dimension_semantics=("parallel",)),
        cost_estimate=cost,
    )(lc_f, fuse_f, gc_f, proj_w, proj_b, sel, ww_f, wb_f, se_w1t, se_w2t)

    return out_flat.reshape(B, Call, H, W)


# ---------------------------------------------------------------------------
# Pure-JAX reference (mirrors the PyTorch forward, NCHW) for a sanity check.
# ---------------------------------------------------------------------------
def asm_reference(lc, fuse, gc, p):
    B, C, H, W = fuse.shape
    I = p["theta_w"].shape[0]

    def conv1x1(x, w, b):                       # w: [O, C_in], b: [O]
        return jnp.einsum("bchw,oc->bohw", x, w) + b.reshape(1, -1, 1, 1)

    def maxpool2(x):
        b_, c_, h_, w_ = x.shape
        return jnp.max(x.reshape(b_, c_, h_ // 2, 2, w_ // 2, 2), axis=(3, 5))

    g_x = maxpool2(conv1x1(fuse, p["g_w"], p["g_b"]))
    g_x = g_x.reshape(B, I, -1).transpose(0, 2, 1)
    theta_x = conv1x1(fuse, p["theta_w"], p["theta_b"])
    theta_x = theta_x.reshape(B, I, -1).transpose(0, 2, 1)
    phi_x = maxpool2(conv1x1(fuse, p["phi_w"], p["phi_b"])).reshape(B, I, -1)
    f = jnp.einsum("bni,bim->bnm", theta_x, phi_x)
    f_div_c = jax.nn.softmax(f, axis=-1)
    y = jnp.einsum("bnm,bmi->bni", f_div_c, g_x)
    y = y.transpose(0, 2, 1).reshape(B, I, H, W)
    wy = conv1x1(y, p["W_w"], p["W_b"])
    wy = (wy * p["bn_scale"].reshape(1, -1, 1, 1)
          + p["bn_shift"].reshape(1, -1, 1, 1))
    z = wy + fuse
    cat = jnp.concatenate([lc, z, gc], axis=1)
    m = jnp.mean(cat, axis=(2, 3))
    h = jnp.maximum(m @ p["se_w1"], 0.0)
    s = jax.nn.sigmoid(h @ p["se_w2"])
    return cat * s[:, :, None, None]


if __name__ == "__main__":
    # ASM(in_channels=16, all_channels=48); lc/gc each 16 channels.
    B, C, H, W = 2, 16, 16, 16
    I = C // 2                       # inter_channels = 8
    C_lc, C_gc = 16, 16
    Call = C_lc + C + C_gc           # all_channels = 48
    r = Call // 16                   # SE reduction hidden = 3

    key = jax.random.PRNGKey(0)
    ks = jax.random.split(key, 20)

    def rnd(k, shape, scale=0.1):
        return (scale * jax.random.normal(k, shape)).astype(jnp.float32)

    # Deterministic synthetic parameters (shapes follow the module __init__,
    # PyTorch layouts: conv weights [out, in], Linear weight transposed here).
    # NOTE: the original module zero-inits the BN gamma/beta of W (so the
    # non-local branch is identity at init); we use nonzero deterministic
    # values so the whole compute path is exercised.
    gamma = rnd(ks[8], (C,), 1.0)
    beta = rnd(ks[9], (C,), 0.1)
    run_mean = jnp.zeros((C,), jnp.float32)
    run_var = jnp.ones((C,), jnp.float32)
    bn_scale = (gamma / jnp.sqrt(run_var + 1e-5)).astype(jnp.float32)
    bn_shift = (beta - run_mean * bn_scale).astype(jnp.float32)

    params = {
        "theta_w": rnd(ks[0], (I, C)), "theta_b": rnd(ks[1], (I,), 0.05),
        "phi_w":   rnd(ks[2], (I, C)), "phi_b":   rnd(ks[3], (I,), 0.05),
        "g_w":     rnd(ks[4], (I, C)), "g_b":     rnd(ks[5], (I,), 0.05),
        "W_w":     rnd(ks[6], (C, I)), "W_b":     rnd(ks[7], (C,), 0.05),
        "bn_scale": bn_scale,
        "bn_shift": bn_shift,
        "se_w1":   rnd(ks[10], (Call, r)),   # Linear(Call, r, bias=False).T
        "se_w2":   rnd(ks[11], (r, Call)),   # Linear(r, Call, bias=False).T
    }

    lc = jax.random.normal(ks[12], (B, C_lc, H, W), jnp.float32)
    fuse = jax.random.normal(ks[13], (B, C, H, W), jnp.float32)
    gc = jax.random.normal(ks[14], (B, C_gc, H, W), jnp.float32)

    out = jax.block_until_ready(jax.jit(asm_forward)(lc, fuse, gc, params))
    ref = jax.block_until_ready(asm_reference(lc, fuse, gc, params))

    assert out.shape == (B, Call, H, W), out.shape
    max_err = float(jnp.max(jnp.abs(out - ref)))
    assert max_err < 2e-2, f"mismatch vs reference: {max_err}"

    print("KERNEL_OK")
</pallas_src>

<mosaic_0001>
module attributes {stable_mosaic.version = 11 : i64} {
  func.func @_asm_kernel(%arg0: i32, %arg1: memref<1x16x256xf32, #tpu.memory_space<vmem>>, %arg2: memref<1x16x256xf32, #tpu.memory_space<vmem>>, %arg3: memref<1x16x256xf32, #tpu.memory_space<vmem>>, %arg4: memref<24x16xf32, #tpu.memory_space<vmem>>, %arg5: memref<24x1xf32, #tpu.memory_space<vmem>>, %arg6: memref<4x256x64xf32, #tpu.memory_space<vmem>>, %arg7: memref<16x8xf32, #tpu.memory_space<vmem>>, %arg8: memref<16x1xf32, #tpu.memory_space<vmem>>, %arg9: memref<48x3xf32, #tpu.memory_space<vmem>>, %arg10: memref<48x3xf32, #tpu.memory_space<vmem>>, %arg11: memref<1x48x256xf32, #tpu.memory_space<vmem>>) attributes {dimension_semantics = [#tpu.dimension_semantics<parallel>], iteration_bounds = array<i64: 2>, scalar_prefetch = 0 : i64, scratch_operands = 0 : i64, tpu.core_type = #tpu.core_type<tc>, window_params = [{transform_indices = @transform_0, window_bounds = array<i64: 1, 16, 256>}, {transform_indices = @transform_1, window_bounds = array<i64: 1, 16, 256>}, {transform_indices = @transform_2, window_bounds = array<i64: 1, 16, 256>}, {pipeline_mode = #tpu.pipeline_mode<synchronous>, transform_indices = @transform_3, window_bounds = array<i64: 24, 16>}, {pipeline_mode = #tpu.pipeline_mode<synchronous>, transform_indices = @transform_4, window_bounds = array<i64: 24, 1>}, {pipeline_mode = #tpu.pipeline_mode<synchronous>, transform_indices = @transform_5, window_bounds = array<i64: 4, 256, 64>}, {pipeline_mode = #tpu.pipeline_mode<synchronous>, transform_indices = @transform_6, window_bounds = array<i64: 16, 8>}, {pipeline_mode = #tpu.pipeline_mode<synchronous>, transform_indices = @transform_7, window_bounds = array<i64: 16, 1>}, {pipeline_mode = #tpu.pipeline_mode<synchronous>, transform_indices = @transform_8, window_bounds = array<i64: 48, 3>}, {pipeline_mode = #tpu.pipeline_mode<synchronous>, transform_indices = @transform_9, window_bounds = array<i64: 48, 3>}, {transform_indices = @transform_10, window_bounds = array<i64: 1, 48, 256>}]} {
    %c0 = arith.constant 0 : index
    %c0_0 = arith.constant 0 : index
    %c0_1 = arith.constant 0 : index
    %0 = vector.load %arg1[%c0, %c0_0, %c0_1] : memref<1x16x256xf32, #tpu.memory_space<vmem>>, vector<1x16x256xf32>
    %1 = vector.shape_cast %0 : vector<1x16x256xf32> to vector<16x256xf32>
    %c0_2 = arith.constant 0 : index
    %c0_3 = arith.constant 0 : index
    %c0_4 = arith.constant 0 : index
    %2 = vector.load %arg2[%c0_2, %c0_3, %c0_4] : memref<1x16x256xf32, #tpu.memory_space<vmem>>, vector<1x16x256xf32>
    %3 = vector.shape_cast %2 : vector<1x16x256xf32> to vector<16x256xf32>
    %c0_5 = arith.constant 0 : index
    %c0_6 = arith.constant 0 : index
    %c0_7 = arith.constant 0 : index
    %4 = vector.load %arg3[%c0_5, %c0_6, %c0_7] : memref<1x16x256xf32, #tpu.memory_space<vmem>>, vector<1x16x256xf32>
    %5 = vector.shape_cast %4 : vector<1x16x256xf32> to vector<16x256xf32>
    %c0_8 = arith.constant 0 : index
    %c0_9 = arith.constant 0 : index
    %6 = vector.load %arg4[%c0_8, %c0_9] : memref<24x16xf32, #tpu.memory_space<vmem>>, vector<24x16xf32>
    %cst = arith.constant dense<0.000000e+00> : vector<24x256xf32>
    %7 = tpu.matmul %6, %3, %cst {dimension_numbers = #tpu.dot_dimension_numbers<[1], [0], [0], [1], [0, 0, 1, 1], [], []>} : vector<24x16xf32>, vector<16x256xf32>, vector<24x256xf32> -> vector<24x256xf32>
    %c0_10 = arith.constant 0 : index
    %c0_11 = arith.constant 0 : index
    %8 = vector.load %arg5[%c0_10, %c0_11] : memref<24x1xf32, #tpu.memory_space<vmem>>, vector<24x1xf32>
    %9 = vector.broadcast %8 : vector<24x1xf32> to vector<24x256xf32>
    %10 = arith.addf %7, %9 : vector<24x256xf32>
    %11 = vector.extract_strided_slice %10 {offsets = [0, 0], sizes = [8, 256], strides = [1, 1]} : vector<24x256xf32> to vector<8x256xf32>
    %12 = vector.extract_strided_slice %10 {offsets = [8, 0], sizes = [16, 256], strides = [1, 1]} : vector<24x256xf32> to vector<16x256xf32>
    %c0_12 = arith.constant 0 : index
    %c0_13 = arith.constant 0 : index
    %c0_14 = arith.constant 0 : index
    %13 = vector.load %arg6[%c0_12, %c0_13, %c0_14] : memref<4x256x64xf32, #tpu.memory_space<vmem>>, vector<1x256x64xf32>
    %14 = vector.shape_cast %13 : vector<1x256x64xf32> to vector<256x64xf32>
    %cst_15 = arith.constant dense<0.000000e+00> : vector<16x64xf32>
    %15 = tpu.matmul %12, %14, %cst_15 {dimension_numbers = #tpu.dot_dimension_numbers<[1], [0], [0], [1], [0, 0, 1, 1], [], []>} : vector<16x256xf32>, vector<256x64xf32>, vector<16x64xf32> -> vector<16x64xf32>
    %c1 = arith.constant 1 : index
    %c0_16 = arith.constant 0 : index
    %c0_17 = arith.constant 0 : index
    %16 = vector.load %arg6[%c1, %c0_16, %c0_17] : memref<4x256x64xf32, #tpu.memory_space<vmem>>, vector<1x256x64xf32>
    %17 = vector.shape_cast %16 : vector<1x256x64xf32> to vector<256x64xf32>
    %cst_18 = arith.constant dense<0.000000e+00> : vector<16x64xf32>
    %18 = tpu.matmul %12, %17, %cst_18 {dimension_numbers = #tpu.dot_dimension_numbers<[1], [0], [0], [1], [0, 0, 1, 1], [], []>} : vector<16x256xf32>, vector<256x64xf32>, vector<16x64xf32> -> vector<16x64xf32>
    %c2 = arith.constant 2 : index
    %c0_19 = arith.constant 0 : index
    %c0_20 = arith.constant 0 : index
    %19 = vector.load %arg6[%c2, %c0_19, %c0_20] : memref<4x256x64xf32, #tpu.memory_space<vmem>>, vector<1x256x64xf32>
    %20 = vector.shape_cast %19 : vector<1x256x64xf32> to vector<256x64xf32>
    %cst_21 = arith.constant dense<0.000000e+00> : vector<16x64xf32>
    %21 = tpu.matmul %12, %20, %cst_21 {dimension_numbers = #tpu.dot_dimension_numbers<[1], [0], [0], [1], [0, 0, 1, 1], [], []>} : vector<16x256xf32>, vector<256x64xf32>, vector<16x64xf32> -> vector<16x64xf32>
    %c3 = arith.constant 3 : index
    %c0_22 = arith.constant 0 : index
    %c0_23 = arith.constant 0 : index
    %22 = vector.load %arg6[%c3, %c0_22, %c0_23] : memref<4x256x64xf32, #tpu.memory_space<vmem>>, vector<1x256x64xf32>
    %23 = vector.shape_cast %22 : vector<1x256x64xf32> to vector<256x64xf32>
    %cst_24 = arith.constant dense<0.000000e+00> : vector<16x64xf32>
    %24 = tpu.matmul %12, %23, %cst_24 {dimension_numbers = #tpu.dot_dimension_numbers<[1], [0], [0], [1], [0, 0, 1, 1], [], []>} : vector<16x256xf32>, vector<256x64xf32>, vector<16x64xf32> -> vector<16x64xf32>
    %25 = arith.maximumf %15, %18 : vector<16x64xf32>
    %26 = arith.maximumf %21, %24 : vector<16x64xf32>
    %27 = arith.maximumf %25, %26 : vector<16x64xf32>
    %28 = vector.extract_strided_slice %27 {offsets = [0, 0], sizes = [8, 64], strides = [1, 1]} : vector<16x64xf32> to vector<8x64xf32>
    %29 = vector.extract_strided_slice %27 {offsets = [8, 0], sizes = [8, 64], strides = [1, 1]} : vector<16x64xf32> to vector<8x64xf32>
    %30 = tpu.transpose %28, [1, 0] : vector<8x64xf32> -> vector<64x8xf32>
    %cst_25 = arith.constant dense<0.000000e+00> : vector<64x256xf32>
    %31 = tpu.matmul %30, %11, %cst_25 {dimension_numbers = #tpu.dot_dimension_numbers<[1], [0], [0], [1], [0, 0, 1, 1], [], []>} : vector<64x8xf32>, vector<8x256xf32>, vector<64x256xf32> -> vector<64x256xf32>
    %cst_26 = arith.constant dense<0xFF800000> : vector<256xf32>
    %32 = vector.multi_reduction <maximumf>, %31, %cst_26 [0] : vector<64x256xf32> to vector<256xf32>
    %33 = vector.shape_cast %32 : vector<256xf32> to vector<1x256xf32>
    %34 = vector.broadcast %33 : vector<1x256xf32> to vector<64x256xf32>
    %35 = arith.subf %31, %34 : vector<64x256xf32>
    %36 = math.exp %35 : vector<64x256xf32>
    %cst_27 = arith.constant dense<0.000000e+00> : vector<256xf32>
    %37 = vector.multi_reduction <add>, %36, %cst_27 [0] : vector<64x256xf32> to vector<256xf32>
    %38 = vector.shape_cast %37 : vector<256xf32> to vector<1x256xf32>
    %39 = tpu.reciprocal %38 {approx = true} : vector<1x256xf32> -> vector<1x256xf32>
    %40 = vector.broadcast %39 : vector<1x256xf32> to vector<64x256xf32>
    %41 = arith.mulf %36, %40 : vector<64x256xf32>
    %cst_28 = arith.constant dense<0.000000e+00> : vector<8x256xf32>
    %42 = tpu.matmul %29, %41, %cst_28 {dimension_numbers = #tpu.dot_dimension_numbers<[1], [0], [0], [1], [0, 0, 1, 1], [], []>} : vector<8x64xf32>, vector<64x256xf32>, vector<8x256xf32> -> vector<8x256xf32>
    %c0_29 = arith.constant 0 : index
    %c0_30 = arith.constant 0 : index
    %43 = vector.load %arg7[%c0_29, %c0_30] : memref<16x8xf32, #tpu.memory_space<vmem>>, vector<16x8xf32>
    %cst_31 = arith.constant dense<0.000000e+00> : vector<16x256xf32>
    %44 = tpu.matmul %43, %42, %cst_31 {dimension_numbers = #tpu.dot_dimension_numbers<[1], [0], [0], [1], [0, 0, 1, 1], [], []>} : vector<16x8xf32>, vector<8x256xf32>, vector<16x256xf32> -> vector<16x256xf32>
    %c0_32 = arith.constant 0 : index
    %c0_33 = arith.constant 0 : index
    %45 = vector.load %arg8[%c0_32, %c0_33] : memref<16x1xf32, #tpu.memory_space<vmem>>, vector<16x1xf32>
    %46 = vector.broadcast %45 : vector<16x1xf32> to vector<16x256xf32>
    %47 = arith.addf %44, %46 : vector<16x256xf32>
    %48 = arith.addf %47, %3 : vector<16x256xf32>
    %49 = tpu.concatenate %1, %48, %5 in 0 : vector<16x256xf32>, vector<16x256xf32>, vector<16x256xf32> -> vector<48x256xf32>
    %cst_34 = arith.constant dense<0.000000e+00> : vector<48xf32>
    %50 = vector.multi_reduction <add>, %49, %cst_34 [1] : vector<48x256xf32> to vector<48xf32>
    %51 = vector.shape_cast %50 : vector<48xf32> to vector<48x1xf32>
    %cst_35 = arith.constant 3.906250e-03 : f32
    %52 = vector.broadcast %cst_35 : f32 to vector<48x1xf32>
    %53 = arith.mulf %51, %52 : vector<48x1xf32>
    %c0_36 = arith.constant 0 : index
    %c0_37 = arith.constant 0 : index
    %54 = vector.load %arg9[%c0_36, %c0_37] : memref<48x3xf32, #tpu.memory_space<vmem>>, vector<48x3xf32>
    %55 = vector.broadcast %53 : vector<48x1xf32> to vector<48x3xf32>
    %56 = arith.mulf %54, %55 : vector<48x3xf32>
    %cst_38 = arith.constant dense<0.000000e+00> : vector<3xf32>
    %57 = vector.multi_reduction <add>, %56, %cst_38 [0] : vector<48x3xf32> to vector<3xf32>
    %58 = vector.shape_cast %57 : vector<3xf32> to vector<1x3xf32>
    %cst_39 = arith.constant 0.000000e+00 : f32
    %59 = vector.broadcast %cst_39 : f32 to vector<1x3xf32>
    %60 = arith.maximumf %58, %59 : vector<1x3xf32>
    %c0_40 = arith.constant 0 : index
    %c0_41 = arith.constant 0 : index
    %61 = vector.load %arg10[%c0_40, %c0_41] : memref<48x3xf32, #tpu.memory_space<vmem>>, vector<48x3xf32>
    %62 = vector.broadcast %60 : vector<1x3xf32> to vector<48x3xf32>
    %63 = arith.mulf %61, %62 : vector<48x3xf32>
    %cst_42 = arith.constant dense<0.000000e+00> : vector<48xf32>
    %64 = vector.multi_reduction <add>, %63, %cst_42 [1] : vector<48x3xf32> to vector<48xf32>
    %65 = vector.shape_cast %64 : vector<48xf32> to vector<48x1xf32>
    %66 = arith.negf %65 : vector<48x1xf32>
    %67 = math.exp %66 : vector<48x1xf32>
    %cst_43 = arith.constant 1.000000e+00 : f32
    %68 = vector.broadcast %cst_43 : f32 to vector<48x1xf32>
    %69 = arith.addf %68, %67 : vector<48x1xf32>
    %70 = arith.divf %68, %69 : vector<48x1xf32>
    %71 = vector.broadcast %70 : vector<48x1xf32> to vector<48x256xf32>
    %72 = arith.mulf %49, %71 : vector<48x256xf32>
    %c0_44 = arith.constant 0 : index
    %c0_45 = arith.constant 0 : index
    %c0_46 = arith.constant 0 : index
    %73 = vector.load %arg11[%c0_44, %c0_45, %c0_46] : memref<1x48x256xf32, #tpu.memory_space<vmem>>, vector<1x48x256xf32>
    %74 = vector.shape_cast %73 : vector<1x48x256xf32> to vector<48x256xf32>
    %75 = vector.shape_cast %72 : vector<48x256xf32> to vector<1x48x256xf32>
    tpu.vector_store %arg11[%c0_44, %c0_45, %c0_46], %75 {strides = array<i32>} : memref<1x48x256xf32, #tpu.memory_space<vmem>>, vector<1x48x256xf32>,
    return
  }
  func.func @transform_0(%arg0: i32) -> (i32, i32, i32) {
    %c0_i32 = arith.constant 0 : i32
    %c0_i32_0 = arith.constant 0 : i32
    %c0_i32_1 = arith.constant 0 : i32
    return %arg0, %c0_i32, %c0_i32_0 : i32, i32, i32
  }
  func.func @transform_1(%arg0: i32) -> (i32, i32, i32) {
    %c0_i32 = arith.constant 0 : i32
    %c0_i32_0 = arith.constant 0 : i32
    %c0_i32_1 = arith.constant 0 : i32
    return %arg0, %c0_i32, %c0_i32_0 : i32, i32, i32
  }
  func.func @transform_2(%arg0: i32) -> (i32, i32, i32) {
    %c0_i32 = arith.constant 0 : i32
    %c0_i32_0 = arith.constant 0 : i32
    %c0_i32_1 = arith.constant 0 : i32
    return %arg0, %c0_i32, %c0_i32_0 : i32, i32, i32
  }
  func.func @transform_3(%arg0: i32) -> (i32, i32) {
    %c0_i32 = arith.constant 0 : i32
    %c0_i32_0 = arith.constant 0 : i32
    %c0_i32_1 = arith.constant 0 : i32
    return %c0_i32, %c0_i32_0 : i32, i32
  }
  func.func @transform_4(%arg0: i32) -> (i32, i32) {
    %c0_i32 = arith.constant 0 : i32
    %c0_i32_0 = arith.constant 0 : i32
    %c0_i32_1 = arith.constant 0 : i32
    return %c0_i32, %c0_i32_0 : i32, i32
  }
  func.func @transform_5(%arg0: i32) -> (i32, i32, i32) {
    %c0_i32 = arith.constant 0 : i32
    %c0_i32_0 = arith.constant 0 : i32
    %c0_i32_1 = arith.constant 0 : i32
    %c0_i32_2 = arith.constant 0 : i32
    return %c0_i32, %c0_i32_0, %c0_i32_1 : i32, i32, i32
  }
  func.func @transform_6(%arg0: i32) -> (i32, i32) {
    %c0_i32 = arith.constant 0 : i32
    %c0_i32_0 = arith.constant 0 : i32
    %c0_i32_1 = arith.constant 0 : i32
    return %c0_i32, %c0_i32_0 : i32, i32
  }
  func.func @transform_7(%arg0: i32) -> (i32, i32) {
    %c0_i32 = arith.constant 0 : i32
    %c0_i32_0 = arith.constant 0 : i32
    %c0_i32_1 = arith.constant 0 : i32
    return %c0_i32, %c0_i32_0 : i32, i32
  }
  func.func @transform_8(%arg0: i32) -> (i32, i32) {
    %c0_i32 = arith.constant 0 : i32
    %c0_i32_0 = arith.constant 0 : i32
    %c0_i32_1 = arith.constant 0 : i32
    return %c0_i32, %c0_i32_0 : i32, i32
  }
  func.func @transform_9(%arg0: i32) -> (i32, i32) {
    %c0_i32 = arith.constant 0 : i32
    %c0_i32_0 = arith.constant 0 : i32
    %c0_i32_1 = arith.constant 0 : i32
    return %c0_i32, %c0_i32_0 : i32, i32
  }
  func.func @transform_10(%arg0: i32) -> (i32, i32, i32) {
    %c0_i32 = arith.constant 0 : i32
    %c0_i32_0 = arith.constant 0 : i32
    %c0_i32_1 = arith.constant 0 : i32
    return %arg0, %c0_i32, %c0_i32_0 : i32, i32, i32
  }
}

</mosaic_0001>

<llo_original>
// kernel: asm_forward.1
$region0: #{asm_forward.1}
  #allocation0 [shape = 'u32[]', space=smem, size = 0x4, offset = 0x4, fixed_abs, tag = 'smem constant byte address 0x4 - core index']
  #allocation1 [shape = 'u32[144,128]{1,0:T(1,128)}', space=vmem, size = 0x12000, scoped, tag = 'internal scratch']
  %s0 = inlined_call_operand.vmem [shape: f32[2,16,256], index: 0, kind: input, shape index: {}]
  %s1 = inlined_call_operand.vmem [shape: f32[2,16,256], index: 1, kind: input, shape index: {}]
  %s2 = inlined_call_operand.vmem [shape: f32[2,16,256], index: 2, kind: input, shape index: {}]
  %s3 = inlined_call_operand.vmem [shape: f32[24,16], index: 3, kind: input, shape index: {}]
  %s4 = inlined_call_operand.vmem [shape: f32[24,1], index: 4, kind: input, shape index: {}]
  %s5 = inlined_call_operand.vmem [shape: f32[4,256,64], index: 5, kind: input, shape index: {}]
  %s6 = inlined_call_operand.vmem [shape: f32[16,8], index: 6, kind: input, shape index: {}]
  %s7 = inlined_call_operand.vmem [shape: f32[16,1], index: 7, kind: input, shape index: {}]
  %s8 = inlined_call_operand.vmem [shape: f32[48,3], index: 8, kind: input, shape index: {}]
  %s9 = inlined_call_operand.vmem [shape: f32[48,3], index: 9, kind: input, shape index: {}]
  %s10 = inlined_call_operand.vmem [shape: f32[2,48,256], index: 10, kind: output, shape index: {}]
  %s11 = sld [smem:[#allocation0]]
  $region73: #{asm_forward.1} parent=0
    _
  %s13 = ssub.s32 1, %s11
  %s14 = scalar_select 0, %s13, %s11
  loop: start=0, step=1, limit=4
  $region2: #{asm_forward.1} parent=0 // loop_pre_header
    _
  $region3: #{asm_forward.1} parent=0 // loop_header
    %s16 = sphi 0, %s20
    %p17 = scmp.ge.s32.totalorder %s16, 4
    %s26 = sphi 0, %s28
    %s29 = sphi 0, %s26
    %s30 = sphi 0, %s29
    %s46 = sphi 0, %s30
    %s52 = sphi 0, %s54
    %s55 = sphi 0, %s52
    %s56 = sphi 0, %s55
    %s72 = sphi 0, %s56
    %s78 = sphi 0, %s80
    %s81 = sphi 0, %s78
    %s82 = sphi 0, %s81
    %s98 = sphi 0, %s82
    %s102 = sphi 0, %s102
    %s104 = sphi 0, %s102
    %s105 = sphi 0, %s104
    %s119 = sphi 0, %s105
    %s123 = sphi 0, %s123
    %s125 = sphi 0, %s123
    %s126 = sphi 0, %s125
    %s140 = sphi 0, %s126
    %s144 = sphi 0, %s144
    %s146 = sphi 0, %s144
    %s147 = sphi 0, %s146
    %s161 = sphi 0, %s147
    %s165 = sphi 0, %s165
    %s167 = sphi 0, %s165
    %s168 = sphi 0, %s167
    %s182 = sphi 0, %s168
    %s186 = sphi 0, %s186
    %s188 = sphi 0, %s186
    %s189 = sphi 0, %s188
    %s203 = sphi 0, %s189
    %s207 = sphi 0, %s207
    %s209 = sphi 0, %s207
    %s210 = sphi 0, %s209
    %s224 = sphi 0, %s210
    %s228 = sphi 0, %s228
    %s230 = sphi 0, %s228
    %s231 = sphi 0, %s230
    %s245 = sphi 0, %s231
    %s251 = sphi 0, %s253
    %s254 = sphi 0, %s251
    %s255 = sphi 0, %s254
    %s271 = sphi 0, %s255
  $region4: #{asm_forward.1} parent=0 // loop_header_branch
    %19 = sbr.rel (%p17) target = $region8
  $region5: #{asm_forward.1} parent=0 // loop_body
    %s21 = ssub.s32 %s16, 1
    %s22 = ssub.s32 %s16, 2
    %s23 = sadd.s32 %s16, 1
    %s24 = ssub.s32 %s16, %s23
    %p25 = scmp.eq.s32.totalorder %s24, 0
    %s27 = sadd.s32 %s26, 1
    %s28 = scalar_select %p25, %s26, %s27
    %p31 = pneg %p25
    %p32 = scmp.eq.s32.totalorder %s16, 1
    %p33 = por %p31, %p32
    %p34 = scmp.ne.s32.totalorder %s26, %s29
    %p35 = scmp.eq.s32.totalorder %s16, 0
    %p36 = por %p34, %p35
    %p37 = scmp.ne.s32.totalorder %s26, %s29
    %p38 = scmp.eq.s32.totalorder %s21, 1
    %p39 = por %p37, %p38
    %p40 = scmp.ne.s32.totalorder %s29, %s30
    %p41 = scmp.eq.s32.totalorder %s21, 0
    %p42 = por %p40, %p41
    %p43 = scmp.ne.s32.totalorder %s29, %s30
    %p44 = scmp.eq.s32.totalorder %s22, 1
    %p45 = por %p43, %p44
    %p47 = scmp.ne.s32.totalorder %s30, %s46
    %p48 = scmp.eq.s32.totalorder %s22, 0
    %p49 = por %p47, %p48
    %s50 = ssub.s32 %s16, %s23
    %p51 = scmp.eq.s32.totalorder %s50, 0
    %s53 = sadd.s32 %s52, 1
    %s54 = scalar_select %p51, %s52, %s53
    %p57 = pneg %p51
    %p58 = scmp.eq.s32.totalorder %s16, 1
    %p59 = por %p57, %p58
    %p60 = scmp.ne.s32.totalorder %s52, %s55
    %p61 = scmp.eq.s32.totalorder %s16, 0
    %p62 = por %p60, %p61
    %p63 = scmp.ne.s32.totalorder %s52, %s55
    %p64 = scmp.eq.s32.totalorder %s21, 1
    %p65 = por %p63, %p64
    %p66 = scmp.ne.s32.totalorder %s55, %s56
    %p67 = scmp.eq.s32.totalorder %s21, 0
    %p68 = por %p66, %p67
    %p69 = scmp.ne.s32.totalorder %s55, %s56
    %p70 = scmp.eq.s32.totalorder %s22, 1
    %p71 = por %p69, %p70
    %p73 = scmp.ne.s32.totalorder %s56, %s72
    %p74 = scmp.eq.s32.totalorder %s22, 0
    %p75 = por %p73, %p74
    %s76 = ssub.s32 %s16, %s23
    %p77 = scmp.eq.s32.totalorder %s76, 0
    %s79 = sadd.s32 %s78, 1
    %s80 = scalar_select %p77, %s78, %s79
    %p83 = pneg %p77
    %p84 = scmp.eq.s32.totalorder %s16, 1
    %p85 = por %p83, %p84
    %p86 = scmp.ne.s32.totalorder %s78, %s81
    %p87 = scmp.eq.s32.totalorder %s16, 0
    %p88 = por %p86, %p87
    %p89 = scmp.ne.s32.totalorder %s78, %s81
    %p90 = scmp.eq.s32.totalorder %s21, 1
    %p91 = por %p89, %p90
    %p92 = scmp.ne.s32.totalorder %s81, %s82
    %p93 = scmp.eq.s32.totalorder %s21, 0
    %p94 = por %p92, %p93
    %p95 = scmp.ne.s32.totalorder %s81, %s82
    %p96 = scmp.eq.s32.totalorder %s22, 1
    %p97 = por %p95, %p96
    %p99 = scmp.ne.s32.totalorder %s82, %s98
    %p100 = scmp.eq.s32.totalorder %s22, 0
    %p101 = por %p99, %p100
    %s103 = sadd.s32 %s102, 1
    %p106 = scmp.eq.s32.totalorder %s16, 1
    %p107 = scmp.ne.s32.totalorder %s102, %s104
    %p108 = scmp.eq.s32.totalorder %s16, 0
    %p109 = por %p107, %p108
    %p110 = scmp.ne.s32.totalorder %s102, %s104
    %p111 = scmp.eq.s32.totalorder %s21, 1
    %p112 = por %p110, %p111
    %p113 = scmp.ne.s32.totalorder %s104, %s105
    %p114 = scmp.eq.s32.totalorder %s21, 0
    %p115 = por %p113, %p114
    %p116 = scmp.ne.s32.totalorder %s104, %s105
    %p117 = scmp.eq.s32.totalorder %s22, 1
    %p118 = por %p116, %p117
    %p120 = scmp.ne.s32.totalorder %s105, %s119
    %p121 = scmp.eq.s32.totalorder %s22, 0
    %p122 = por %p120, %p121
    %s124 = sadd.s32 %s123, 1
    %p127 = scmp.eq.s32.totalorder %s16, 1
    %p128 = scmp.ne.s32.totalorder %s123, %s125
    %p129 = scmp.eq.s32.totalorder %s16, 0
    %p130 = por %p128, %p129
    %p131 = scmp.ne.s32.totalorder %s123, %s125
    %p132 = scmp.eq.s32.totalorder %s21, 1
    %p133 = por %p131, %p132
    %p134 = scmp.ne.s32.totalorder %s125, %s126
    %p135 = scmp.eq.s32.totalorder %s21, 0
    %p136 = por %p134, %p135
    %p137 = scmp.ne.s32.totalorder %s125, %s126
    %p138 = scmp.eq.s32.totalorder %s22, 1
    %p139 = por %p137, %p138
    %p141 = scmp.ne.s32.totalorder %s126, %s140
    %p142 = scmp.eq.s32.totalorder %s22, 0
    %p143 = por %p141, %p142
    %s145 = sadd.s32 %s144, 1
    %p148 = scmp.eq.s32.totalorder %s16, 1
    %p149 = scmp.ne.s32.totalorder %s144, %s146
    %p150 = scmp.eq.s32.totalorder %s16, 0
    %p151 = por %p149, %p150
    %p152 = scmp.ne.s32.totalorder %s144, %s146
    %p153 = scmp.eq.s32.totalorder %s21, 1
    %p154 = por %p152, %p153
    %p155 = scmp.ne.s32.totalorder %s146, %s147
    %p156 = scmp.eq.s32.totalorder %s21, 0
    %p157 = por %p155, %p156
    %p158 = scmp.ne.s32.totalorder %s146, %s147
    %p159 = scmp.eq.s32.totalorder %s22, 1
    %p160 = por %p158, %p159
    %p162 = scmp.ne.s32.totalorder %s147, %s161
    %p163 = scmp.eq.s32.totalorder %s22, 0
    %p164 = por %p162, %p163
    %s166 = sadd.s32 %s165, 1
    %p169 = scmp.eq.s32.totalorder %s16, 1
    %p170 = scmp.ne.s32.totalorder %s165, %s167
    %p171 = scmp.eq.s32.totalorder %s16, 0
    %p172 = por %p170, %p171
    %p173 = scmp.ne.s32.totalorder %s165, %s167
    %p174 = scmp.eq.s32.totalorder %s21, 1
    %p175 = por %p173, %p174
    %p176 = scmp.ne.s32.totalorder %s167, %s168
    %p177 = scmp.eq.s32.totalorder %s21, 0
    %p178 = por %p176, %p177
    %p179 = scmp.ne.s32.totalorder %s167, %s168
    %p180 = scmp.eq.s32.totalorder %s22, 1
    %p181 = por %p179, %p180
    %p183 = scmp.ne.s32.totalorder %s168, %s182
    %p184 = scmp.eq.s32.totalorder %s22, 0
    %p185 = por %p183, %p184
    %s187 = sadd.s32 %s186, 1
    %p190 = scmp.eq.s32.totalorder %s16, 1
    %p191 = scmp.ne.s32.totalorder %s186, %s188
    %p192 = scmp.eq.s32.totalorder %s16, 0
    %p193 = por %p191, %p192
    %p194 = scmp.ne.s32.totalorder %s186, %s188
    %p195 = scmp.eq.s32.totalorder %s21, 1
    %p196 = por %p194, %p195
    %p197 = scmp.ne.s32.totalorder %s188, %s189
    %p198 = scmp.eq.s32.totalorder %s21, 0
    %p199 = por %p197, %p198
    %p200 = scmp.ne.s32.totalorder %s188, %s189
    %p201 = scmp.eq.s32.totalorder %s22, 1
    %p202 = por %p200, %p201
    %p204 = scmp.ne.s32.totalorder %s189, %s203
    %p205 = scmp.eq.s32.totalorder %s22, 0
    %p206 = por %p204, %p205
    %s208 = sadd.s32 %s207, 1
    %p211 = scmp.eq.s32.totalorder %s16, 1
    %p212 = scmp.ne.s32.totalorder %s207, %s209
    %p213 = scmp.eq.s32.totalorder %s16, 0
    %p214 = por %p212, %p213
    %p215 = scmp.ne.s32.totalorder %s207, %s209
    %p216 = scmp.eq.s32.totalorder %s21, 1
    %p217 = por %p215, %p216
    %p218 = scmp.ne.s32.totalorder %s209, %s210
    %p219 = scmp.eq.s32.totalorder %s21, 0
    %p220 = por %p218, %p219
    %p221 = scmp.ne.s32.totalorder %s209, %s210
    %p222 = scmp.eq.s32.totalorder %s22, 1
    %p223 = por %p221, %p222
    %p225 = scmp.ne.s32.totalorder %s210, %s224
    %p226 = scmp.eq.s32.totalorder %s22, 0
    %p227 = por %p225, %p226
    %s229 = sadd.s32 %s228, 1
    %p232 = scmp.eq.s32.totalorder %s16, 1
    %p233 = scmp.ne.s32.totalorder %s228, %s230
    %p234 = scmp.eq.s32.totalorder %s16, 0
    %p235 = por %p233, %p234
    %p236 = scmp.ne.s32.totalorder %s228, %s230
    %p237 = scmp.eq.s32.totalorder %s21, 1
    %p238 = por %p236, %p237
    %p239 = scmp.ne.s32.totalorder %s230, %s231
    %p240 = scmp.eq.s32.totalorder %s21, 0
    %p241 = por %p239, %p240
    %p242 = scmp.ne.s32.totalorder %s230, %s231
    %p243 = scmp.eq.s32.totalorder %s22, 1
    %p244 = por %p242, %p243
    %p246 = scmp.ne.s32.totalorder %s231, %s245
    %p247 = scmp.eq.s32.totalorder %s22, 0
    %p248 = por %p246, %p247
    %s249 = ssub.s32 %s16, %s23
    %p250 = scmp.eq.s32.totalorder %s249, 0
    %s252 = sadd.s32 %s251, 1
    %s253 = scalar_select %p250, %s251, %s252
    %p256 = pneg %p250
    %p257 = scmp.eq.s32.totalorder %s16, 1
    %p258 = por %p256, %p257
    %p259 = scmp.ne.s32.totalorder %s251, %s254
    %p260 = scmp.eq.s32.totalorder %s16, 0
    %p261 = por %p259, %p260
    %p262 = scmp.ne.s32.totalorder %s251, %s254
    %p263 = scmp.eq.s32.totalorder %s21, 1
    %p264 = por %p262, %p263
    %p265 = scmp.ne.s32.totalorder %s254, %s255
    %p266 = scmp.eq.s32.totalorder %s21, 0
    %p267 = por %p265, %p266
    %p268 = scmp.ne.s32.totalorder %s254, %s255
    %p269 = scmp.eq.s32.totalorder %s22, 1
    %p270 = por %p268, %p269
    %p272 = scmp.ne.s32.totalorder %s255, %s271
    %p273 = scmp.eq.s32.totalorder %s22, 0
    %p274 = por %p272, %p273
    %p275 = scmp.le.s32.totalorder 1, %s16
    %p276 = scmp.lt.s32.totalorder %s16, 3
    %p277 = pnand %p275, %p276
    %p278 = pneg %p277
    // Predicated region
    $region9: #{asm_forward.1} parent=5 // pred_check
      _
    $region10: #{asm_forward.1} parent=5 // pred_check_branch
      %280 = sbr.rel (%p277) target = $region12
    $region11: #{asm_forward.1} parent=5 // pred_region
      %s281 = ssub.s32 %s16, 1
      // Predicated region
      $region13: #{asm_forward.1} parent=11 // pred_check
        %p282 = pneg %p115
      $region14: #{asm_forward.1} parent=11 // pred_check_branch
        %284 = sbr.rel (%p282) target = $region16
      $region15: #{asm_forward.1} parent=11 // pred_region
        _
      $region16: #{asm_forward.1} parent=11 // pred_fallthru
        _
      // Predicated region
      $region17: #{asm_forward.1} parent=11 // pred_check
        %p285 = pneg %p136
      $region18: #{asm_forward.1} parent=11 // pred_check_branch
        %287 = sbr.rel (%p285) target = $region20
      $region19: #{asm_forward.1} parent=11 // pred_region
        _
      $region20: #{asm_forward.1} parent=11 // pred_fallthru
        _
      // Predicated region
      $region21: #{asm_forward.1} parent=11 // pred_check
        %p288 = pneg %p157
      $region22: #{asm_forward.1} parent=11 // pred_check_branch
        %290 = sbr.rel (%p288) target = $region24
      $region23: #{asm_forward.1} parent=11 // pred_region
        _
      $region24: #{asm_forward.1} parent=11 // pred_fallthru
        _
      // Predicated region
      $region25: #{asm_forward.1} parent=11 // pred_check
        %p291 = pneg %p178
      $region26: #{asm_forward.1} parent=11 // pred_check_branch
        %293 = sbr.rel (%p291) target = $region28
      $region27: #{asm_forward.1} parent=11 // pred_region
        _
      $region28: #{asm_forward.1} parent=11 // pred_fallthru
        _
      // Predicated region
      $region29: #{asm_forward.1} parent=11 // pred_check
        %p294 = pneg %p199
      $region30: #{asm_forward.1} parent=11 // pred_check_branch
        %296 = sbr.rel (%p294) target = $region32
      $region31: #{asm_forward.1} parent=11 // pred_region
        _
      $region32: #{asm_forward.1} parent=11 // pred_fallthru
        _
      // Predicated region
      $region33: #{asm_forward.1} parent=11 // pred_check
        %p297 = pneg %p220
      $region34: #{asm_forward.1} parent=11 // pred_check_branch
        %299 = sbr.rel (%p297) target = $region36
      $region35: #{asm_forward.1} parent=11 // pred_region
        _
      $region36: #{asm_forward.1} parent=11 // pred_fallthru
        _
      // Predicated region
      $region37: #{asm_forward.1} parent=11 // pred_check
        %p300 = pneg %p241
      $region38: #{asm_forward.1} parent=11 // pred_check_branch
        %302 = sbr.rel (%p300) target = $region40
      $region39: #{asm_forward.1} parent=11 // pred_region
        _
      $region40: #{asm_forward.1} parent=11 // pred_fallthru
        _
    $region12: #{asm_forward.1} parent=5 // pred_fallthru
      _
    %p303 = scmp.lt.s32.totalorder %s16, 2
    // Predicated region
    $region41: #{asm_forward.1} parent=5 // pred_check
      %p304 = pneg %p303
    $region42: #{asm_forward.1} parent=5 // pred_check_branch
      %306 = sbr.rel (%p304) target = $region44
    $region43: #{asm_forward.1} parent=5 // pred_region
      // Predicated region
      $region45: #{asm_forward.1} parent=43 // pred_check
        %p307 = pneg %p36
      $region46: #{asm_forward.1} parent=43 // pred_check_branch
        %309 = sbr.rel (%p307) target = $region48
      $region47: #{asm_forward.1} parent=43 // pred_region
        %p310 = scmp.lt.s32.totalorder %s16, 1
        %s311 = scalar_select %p310, %s16, 1
        %s312 = smul.addr %s311, 4
        %s313 = smul.addr %s312, 8
        %s314 = scalar_lea.vmem %s0, %s313
      $region48: #{asm_forward.1} parent=43 // pred_fallthru
        _
      // Predicated region
      $region49: #{asm_forward.1} parent=43 // pred_check
        %p315 = pneg %p62
      $region50: #{asm_forward.1} parent=43 // pred_check_branch
        %317 = sbr.rel (%p315) target = $region52
      $region51: #{asm_forward.1} parent=43 // pred_region
        %p318 = scmp.lt.s32.totalorder %s16, 1
        %s319 = scalar_select %p318, %s16, 1
        %s320 = smul.addr %s319, 4
        %s321 = smul.addr %s320, 8
        %s322 = scalar_lea.vmem %s1, %s321
      $region52: #{asm_forward.1} parent=43 // pred_fallthru
        _
      // Predicated region
      $region53: #{asm_forward.1} parent=43 // pred_check
        %p323 = pneg %p88
      $region54: #{asm_forward.1} parent=43 // pred_check_branch
        %325 = sbr.rel (%p323) target = $region56
      $region55: #{asm_forward.1} parent=43 // pred_region
        %p326 = scmp.lt.s32.totalorder %s16, 1
        %s327 = scalar_select %p326, %s16, 1
        %s328 = smul.addr %s327, 4
        %s329 = smul.addr %s328, 8
        %s330 = scalar_lea.vmem %s2, %s329
      $region56: #{asm_forward.1} parent=43 // pred_fallthru
        _
    $region44: #{asm_forward.1} parent=5 // pred_fallthru
      _
    %p331 = scmp.le.s32.totalorder 1, %s16
    %p332 = scmp.lt.s32.totalorder %s16, 3
    %p333 = pnand %p331, %p332
    %p334 = pneg %p333
    // Predicated region
    $region57: #{asm_forward.1} parent=5 // pred_check
      _
    $region58: #{asm_forward.1} parent=5 // pred_check_branch
      %336 = sbr.rel (%p333) target = $region60
    $region59: #{asm_forward.1} parent=5 // pred_region
      %s337 = ssub.s32 %s16, 1
      %p338 = scmp.lt.s32.totalorder %s21, 1
      %s339 = scalar_select %p338, %s21, 1
      %s340 = smul.addr %s339, 4
      %s341 = smul.addr %s340, 8
      %s342 = scalar_lea.vmem %s0, %s341
      %p343 = pneg %p42
      %p344 = pneg %p39
      %p345 = scmp.lt.s32.totalorder %s21, 1
      %s346 = scalar_select %p345, %s21, 1
      %s347 = smul.addr %s346, 4
      %s348 = smul.addr %s347, 8
      %s349 = scalar_lea.vmem %s1, %s348
      %p350 = pneg %p68
      %p351 = pneg %p65
      %p352 = scmp.lt.s32.totalorder %s21, 1
      %s353 = scalar_select %p352, %s21, 1
      %s354 = smul.addr %s353, 4
      %s355 = smul.addr %s354, 8
      %s356 = scalar_lea.vmem %s2, %s355
      %p357 = pneg %p94
      %p358 = pneg %p91
      %p359 = pneg %p115
      %p360 = pneg %p112
      %p361 = pneg %p136
      %p362 = pneg %p133
      %p363 = pneg %p157
      %p364 = pneg %p154
      %p365 = pneg %p178
      %p366 = pneg %p175
      %p367 = pneg %p199
      %p368 = pneg %p196
      %p369 = pneg %p220
      %p370 = pneg %p217
      %p371 = pneg %p241
      %p372 = pneg %p238
      %p373 = pneg %p267
      %p374 = pneg %p264
      %p375 = scmp.lt.s32.totalorder %s21, 1
      %s376 = scalar_select %p375, %s21, 1
      %s377 = smul.addr %s376, 12
      %s378 = smul.addr %s377, 8
      %s379 = scalar_lea.vmem %s10, %s378
      %p380 = scmp.lt.s32.totalorder %s21, 1
      %s381 = scalar_select %p380, %s21, 1
      %s382 = smul.addr %s381, 4
      %s383 = smul.addr %s382, 8
      %s384 = scalar_lea.vmem %s0, %s383
      %p385 = scmp.lt.s32.totalorder %s21, 1
      %s386 = scalar_select %p385, %s21, 1
      %s387 = smul.addr %s386, 4
      %s388 = smul.addr %s387, 8
      %s389 = scalar_lea.vmem %s1, %s388
      %p390 = scmp.lt.s32.totalorder %s21, 1
      %s391 = scalar_select %p390, %s21, 1
      %s392 = smul.addr %s391, 4
      %s393 = smul.addr %s392, 8
      %s394 = scalar_lea.vmem %s2, %s393
      %p395 = scmp.lt.s32.totalorder %s21, 1
      %s396 = scalar_select %p395, %s21, 1
      %s397 = smul.addr %s396, 12
      %s398 = smul.addr %s397, 8
      %s399 = scalar_lea.vmem %s10, %s398
      %v400 = vld [vmem:[%s384] sm:$0xff]
      %v401 = vld [vmem:[%s384 + $0x8] sm:$0xff]
      %v402 = vld [vmem:[%s384 + $0x10] sm:$0xff]
      %v403 = vld [vmem:[%s384 + $0x18] sm:$0xff]
      %v404 = vld [vmem:[%s389] sm:$0xff]
      %v405 = vld [vmem:[%s389 + $0x8] sm:$0xff]
      %v406 = vld [vmem:[%s389 + $0x10] sm:$0xff]
      %v407 = vld [vmem:[%s389 + $0x18] sm:$0xff]
      %v408 = vld [vmem:[%s394] sm:$0xff]
      %v409 = vld [vmem:[%s394 + $0x8] sm:$0xff]
      %v410 = vld [vmem:[%s394 + $0x10] sm:$0xff]
      %v411 = vld [vmem:[%s394 + $0x18] sm:$0xff]
      %v412 = vld [vmem:[%s3] sm:$0xff]
      %v413 = vld [vmem:[%s3 + $0x8] sm:$0xff]
      %v414 = vld [vmem:[%s3 + $0x10] sm:$0xff]
      %v415 = vld [vmem:[%s4] sm:$0xff]
      %v416 = vld [vmem:[%s4 + $0x8] sm:$0xff]
      %v417 = vld [vmem:[%s4 + $0x10] sm:$0xff]
      %419 = vset.pattern.permute.xlu0 0
      %420 = vperm.xlu0 %419, %v415
      %v421 = vpop.permute.xlu0 %420
      %424 = vset.pattern.permute.xlu0 0
      %425 = vperm.xlu0 %424, %v416
      %v426 = vpop.permute.xlu0 %425
      %429 = vset.pattern.permute.xlu0 0
      %430 = vperm.xlu0 %429, %v417
      %v431 = vpop.permute.xlu0 %430
      %vm433 = vcmask 130048
      %v435 = vsel %vm433, %v412, 0
      %v438 = vsel %vm433, %v413, 0
      %v441 = vsel %vm433, %v414, 0
      %443 = vmatprep.subr.mxu0 %v405
      %444 = vmatpush1.msra.mxu0 %v404
      %445 = vmatprep.subr.mxu0 %v407
      %446 = vmatpush1.msra.mxu0 %v406
      %447 = vmatprep.subr.mxu0 0.0
      %448 = vmatpush1.msra.mxu0 0.0
      %449 = vmatprep.subr.mxu0 0.0
      %450 = vmatpush1.msra.mxu0 0.0
      %451 = vmatprep.subr.mxu0 0.0
      %452 = vmatpush1.msra.mxu0 0.0
      %453 = vmatprep.subr.mxu0 0.0
      %454 = vmatpush1.msra.mxu0 0.0
      %455 = vmatprep.subr.mxu0 0.0
      %456 = vmatpush1.msra.mxu0 0.0
      %457 = vmatprep.subr.mxu0 0.0
      %458 = vmatpush1.msra.mxu0 0.0
      %459 = vmatprep.subr.mxu0 0.0
      %460 = vmatpush1.msra.mxu0 0.0
      %461 = vmatprep.subr.mxu0 0.0
      %462 = vmatpush1.msra.mxu0 0.0
      %463 = vmatprep.subr.mxu0 0.0
      %464 = vmatpush1.msra.mxu0 0.0
      %465 = vmatprep.subr.mxu0 0.0
      %466 = vmatpush1.msra.mxu0 0.0
      %467 = vmatprep.subr.mxu0 0.0
      %468 = vmatpush1.msra.mxu0 0.0
      %469 = vmatprep.subr.mxu0 0.0
      %470 = vmatpush1.msra.mxu0 0.0
      %471 = vmatprep.subr.mxu0 0.0
      %472 = vmatpush1.msra.mxu0 0.0
      %473 = vmatprep.subr.mxu0 0.0
      %474 = vmatpush1.msra.mxu0 0.0
      %475 = vmatprep.subr.mxu0 0.0
      %476 = vmatpush1.msra.mxu0 0.0
      %477 = vmatprep.subr.mxu0 0.0
      %478 = vmatpush1.msra.mxu0 0.0
      %479 = vmatprep.subr.mxu0 0.0
      %480 = vmatpush1.msra.mxu0 0.0
      %481 = vmatprep.subr.mxu0 0.0
      %482 = vmatpush1.msra.mxu0 0.0
      %483 = vmatprep.subr.mxu0 0.0
      %484 = vmatpush1.msra.mxu0 0.0
      %485 = vmatprep.subr.mxu0 0.0
      %486 = vmatpush1.msra.mxu0 0.0
      %487 = vmatprep.subr.mxu0 0.0
      %488 = vmatpush1.msra.mxu0 0.0
      %489 = vmatprep.subr.mxu0 0.0
      %490 = vmatpush1.msra.mxu0 0.0
      %491 = vmatprep.subr.mxu0 0.0
      %492 = vmatpush1.msra.mxu0 0.0
      %493 = vmatprep.subr.mxu0 0.0
      %494 = vmatpush1.msra.mxu0 0.0
      %495 = vmatprep.subr.mxu0 0.0
      %496 = vmatpush1.msra.mxu0 0.0
      %497 = vmatprep.subr.mxu0 0.0
      %498 = vmatpush1.msra.mxu0 0.0
      %499 = vmatprep.subr.mxu0 0.0
      %500 = vmatpush1.msra.mxu0 0.0
      %501 = vmatprep.subr.mxu0 0.0
      %502 = vmatpush1.msra.mxu0 0.0
      %503 = vmatprep.subr.mxu0 0.0
      %504 = vmatpush1.msra.mxu0 0.0
      %505 = vmatprep.subr.mxu0 0.0
      %506 = vmatpush1.msra.mxu0 0.0
      %507 = vmatprep.mubr.f32.mxu0 0.0
      %508 = vmatmul.mubr.f32.gmra.mrb[0].mxu0 %v435
      %v509 = vpop.f32.mrb[0].mxu0
      %v510 = vadd.f32 %v421, %v509
      %v511 = vpop.f32.mrb[0].mxu0
      %v512 = vadd.f32 %v421, %v511
      %513 = vmatprep.mubr.f32.mxu0 0.0
      %514 = vmatmul.mubr.f32.gmra.mrb[0].mxu0 %v438
      %v515 = vpop.f32.mrb[0].mxu0
      %v516 = vadd.f32 %v426, %v515
      %v517 = vpop.f32.mrb[0].mxu0
      %v518 = vadd.f32 %v426, %v517
      %519 = vmatprep.mubr.f32.mxu0 0.0
      %520 = vmatmul.mubr.f32.gmra.mrb[0].mxu0 %v441
      %v521 = vpop.f32.mrb[0].mxu0
      %v522 = vadd.f32 %v431, %v521
      %v523 = vpop.f32.mrb[0].mxu0
      %v524 = vadd.f32 %v431, %v523
      %525 = vdwg.mxu0
      %v526 = vld [vmem:[%s5] sm:$0xff]
      %v527 = vld [vmem:[%s5 + $0x8] sm:$0xff]
      %v528 = vld [vmem:[%s5 + $0x10] sm:$0xff]
      %v529 = vld [vmem:[%s5 + $0x18] sm:$0xff]
      %v530 = vld [vmem:[%s5 + $0x20] sm:$0xff]
      %v531 = vld [vmem:[%s5 + $0x28] sm:$0xff]
      %v532 = vld [vmem:[%s5 + $0x30] sm:$0xff]
      %v533 = vld [vmem:[%s5 + $0x38] sm:$0xff]
      %v534 = vld [vmem:[%s5 + $0x40] sm:$0xff]
      %v535 = vld [vmem:[%s5 + $0x48] sm:$0xff]
      %v536 = vld [vmem:[%s5 + $0x50] sm:$0xff]
      %v537 = vld [vmem:[%s5 + $0x58] sm:$0xff]
      %v538 = vld [vmem:[%s5 + $0x60] sm:$0xff]
      %v539 = vld [vmem:[%s5 + $0x68] sm:$0xff]
      %v540 = vld [vmem:[%s5 + $0x70] sm:$0xff]
      %v541 = vld [vmem:[%s5 + $0x78] sm:$0xff]
      %v542 = vld [vmem:[%s5 + $0x80] sm:$0xff]
      %v543 = vld [vmem:[%s5 + $0x88] sm:$0xff]
      %v544 = vld [vmem:[%s5 + $0x90] sm:$0xff]
      %v545 = vld [vmem:[%s5 + $0x98] sm:$0xff]
      %v546 = vld [vmem:[%s5 + $0xa0] sm:$0xff]
      %v547 = vld [vmem:[%s5 + $0xa8] sm:$0xff]
      %v548 = vld [vmem:[%s5 + $0xb0] sm:$0xff]
      %v549 = vld [vmem:[%s5 + $0xb8] sm:$0xff]
      %v550 = vld [vmem:[%s5 + $0xc0] sm:$0xff]
      %v551 = vld [vmem:[%s5 + $0xc8] sm:$0xff]
      %v552 = vld [vmem:[%s5 + $0xd0] sm:$0xff]
      %v553 = vld [vmem:[%s5 + $0xd8] sm:$0xff]
      %v554 = vld [vmem:[%s5 + $0xe0] sm:$0xff]
      %v555 = vld [vmem:[%s5 + $0xe8] sm:$0xff]
      %v556 = vld [vmem:[%s5 + $0xf0] sm:$0xff]
      %v557 = vld [vmem:[%s5 + $0xf8] sm:$0xff]
      %558 = vmatprep.subr.mxu0 0.0
      %559 = vmatpush1.msra.mxu0 %v526
      %560 = vmatprep.subr.mxu0 0.0
      %561 = vmatpush1.msra.mxu0 %v527
      %562 = vmatprep.subr.mxu0 0.0
      %563 = vmatpush1.msra.mxu0 %v528
      %564 = vmatprep.subr.mxu0 0.0
      %565 = vmatpush1.msra.mxu0 %v529
      %566 = vmatprep.subr.mxu0 0.0
      %567 = vmatpush1.msra.mxu0 %v530
      %568 = vmatprep.subr.mxu0 0.0
      %569 = vmatpush1.msra.mxu0 %v531
      %570 = vmatprep.subr.mxu0 0.0
      %571 = vmatpush1.msra.mxu0 %v532
      %572 = vmatprep.subr.mxu0 0.0
      %573 = vmatpush1.msra.mxu0 %v533
      %574 = vmatprep.subr.mxu0 0.0
      %575 = vmatpush1.msra.mxu0 %v534
      %576 = vmatprep.subr.mxu0 0.0
      %577 = vmatpush1.msra.mxu0 %v535
      %578 = vmatprep.subr.mxu0 0.0
      %579 = vmatpush1.msra.mxu0 %v536
      %580 = vmatprep.subr.mxu0 0.0
      %581 = vmatpush1.msra.mxu0 %v537
      %582 = vmatprep.subr.mxu0 0.0
      %583 = vmatpush1.msra.mxu0 %v538
      %584 = vmatprep.subr.mxu0 0.0
      %585 = vmatpush1.msra.mxu0 %v539
      %586 = vmatprep.subr.mxu0 0.0
      %587 = vmatpush1.msra.mxu0 %v540
      %588 = vmatprep.subr.mxu0 0.0
      %589 = vmatpush1.msra.mxu0 %v541
      %590 = vmatprep.subr.mxu0 0.0
      %591 = vmatpush1.msra.mxu0 %v542
      %592 = vmatprep.subr.mxu0 0.0
      %593 = vmatpush1.msra.mxu0 %v543
      %594 = vmatprep.subr.mxu0 0.0
      %595 = vmatpush1.msra.mxu0 %v544
      %596 = vmatprep.subr.mxu0 0.0
      %597 = vmatpush1.msra.mxu0 %v545
      %598 = vmatprep.subr.mxu0 0.0
      %599 = vmatpush1.msra.mxu0 %v546
      %600 = vmatprep.subr.mxu0 0.0
      %601 = vmatpush1.msra.mxu0 %v547
      %602 = vmatprep.subr.mxu0 0.0
      %603 = vmatpush1.msra.mxu0 %v548
      %604 = vmatprep.subr.mxu0 0.0
      %605 = vmatpush1.msra.mxu0 %v549
      %606 = vmatprep.subr.mxu0 0.0
      %607 = vmatpush1.msra.mxu0 %v550
      %608 = vmatprep.subr.mxu0 0.0
      %609 = vmatpush1.msra.mxu0 %v551
      %610 = vmatprep.subr.mxu0 0.0
      %611 = vmatpush1.msra.mxu0 %v552
      %612 = vmatprep.subr.mxu0 0.0
      %613 = vmatpush1.msra.mxu0 %v553
      %614 = vmatprep.subr.mxu0 0.0
      %615 = vmatpush1.msra.mxu0 %v554
      %616 = vmatprep.subr.mxu0 0.0
      %617 = vmatpush1.msra.mxu0 %v555
      %618 = vmatprep.subr.mxu0 0.0
      %619 = vmatpush1.msra.mxu0 %v556
      %620 = vmatprep.subr.mxu0 0.0
      %621 = vmatpush1.msra.mxu0 %v557
      %622 = vmatprep.mubr.f32.mxu0 %v518
      %623 = vmatmul.mubr.f32.gmra.mrb[0].mxu0 %v516
      %v624 = vpop.f32.mrb[0].mxu0
      %v625 = vadd.f32 0.0, %v624
      %v626 = vpop.f32.mrb[0].mxu0
      %627 = vmatprep.mubr.f32.mxu0 %v524
      %628 = vmatmul.mubr.f32.gmra.mrb[0].mxu0 %v522
      %v629 = vpop.f32.mrb[0].mxu0
      %v630 = vadd.f32 0.0, %v629
      %v631 = vpop.f32.mrb[0].mxu0
      %632 = vdwg.mxu0
      %s633 = scalar_lea.vmem %s5, 256
      %v634 = vld [vmem:[%s633] sm:$0xff]
      %v635 = vld [vmem:[%s633 + $0x8] sm:$0xff]
      %v636 = vld [vmem:[%s633 + $0x10] sm:$0xff]
      %v637 = vld [vmem:[%s633 + $0x18] sm:$0xff]
      %v638 = vld [vmem:[%s633 + $0x20] sm:$0xff]
      %v639 = vld [vmem:[%s633 + $0x28] sm:$0xff]
      %v640 = vld [vmem:[%s633 + $0x30] sm:$0xff]
      %v641 = vld [vmem:[%s633 + $0x38] sm:$0xff]
      %v642 = vld [vmem:[%s633 + $0x40] sm:$0xff]
      %v643 = vld [vmem:[%s633 + $0x48] sm:$0xff]
      %v644 = vld [vmem:[%s633 + $0x50] sm:$0xff]
      %v645 = vld [vmem:[%s633 + $0x58] sm:$0xff]
      %v646 = vld [vmem:[%s633 + $0x60] sm:$0xff]
      %v647 = vld [vmem:[%s633 + $0x68] sm:$0xff]
      %v648 = vld [vmem:[%s633 + $0x70] sm:$0xff]
      %v649 = vld [vmem:[%s633 + $0x78] sm:$0xff]
      %v650 = vld [vmem:[%s633 + $0x80] sm:$0xff]
      %v651 = vld [vmem:[%s633 + $0x88] sm:$0xff]
      %v652 = vld [vmem:[%s633 + $0x90] sm:$0xff]
      %v653 = vld [vmem:[%s633 + $0x98] sm:$0xff]
      %v654 = vld [vmem:[%s633 + $0xa0] sm:$0xff]
      %v655 = vld [vmem:[%s633 + $0xa8] sm:$0xff]
      %v656 = vld [vmem:[%s633 + $0xb0] sm:$0xff]
      %v657 = vld [vmem:[%s633 + $0xb8] sm:$0xff]
      %v658 = vld [vmem:[%s633 + $0xc0] sm:$0xff]
      %v659 = vld [vmem:[%s633 + $0xc8] sm:$0xff]
      %v660 = vld [vmem:[%s633 + $0xd0] sm:$0xff]
      %v661 = vld [vmem:[%s633 + $0xd8] sm:$0xff]
      %v662 = vld [vmem:[%s633 + $0xe0] sm:$0xff]
      %v663 = vld [vmem:[%s633 + $0xe8] sm:$0xff]
      %v664 = vld [vmem:[%s633 + $0xf0] sm:$0xff]
      %v665 = vld [vmem:[%s633 + $0xf8] sm:$0xff]
      %666 = vmatprep.subr.mxu0 0.0
      %667 = vmatpush1.msra.mxu0 %v634
      %668 = vmatprep.subr.mxu0 0.0
      %669 = vmatpush1.msra.mxu0 %v635
      %670 = vmatprep.subr.mxu0 0.0
      %671 = vmatpush1.msra.mxu0 %v636
      %672 = vmatprep.subr.mxu0 0.0
      %673 = vmatpush1.msra.mxu0 %v637
      %674 = vmatprep.subr.mxu0 0.0
      %675 = vmatpush1.msra.mxu0 %v638
      %676 = vmatprep.subr.mxu0 0.0
      %677 = vmatpush1.msra.mxu0 %v639
      %678 = vmatprep.subr.mxu0 0.0
      %679 = vmatpush1.msra.mxu0 %v640
      %680 = vmatprep.subr.mxu0 0.0
      %681 = vmatpush1.msra.mxu0 %v641
      %682 = vmatprep.subr.mxu0 0.0
      %683 = vmatpush1.msra.mxu0 %v642
      %684 = vmatprep.subr.mxu0 0.0
      %685 = vmatpush1.msra.mxu0 %v643
      %686 = vmatprep.subr.mxu0 0.0
      %687 = vmatpush1.msra.mxu0 %v644
      %688 = vmatprep.subr.mxu0 0.0
      %689 = vmatpush1.msra.mxu0 %v645
      %690 = vmatprep.subr.mxu0 0.0
      %691 = vmatpush1.msra.mxu0 %v646
      %692 = vmatprep.subr.mxu0 0.0
      %693 = vmatpush1.msra.mxu0 %v647
      %694 = vmatprep.subr.mxu0 0.0
      %695 = vmatpush1.msra.mxu0 %v648
      %696 = vmatprep.subr.mxu0 0.0
      %697 = vmatpush1.msra.mxu0 %v649
      %698 = vmatprep.subr.mxu0 0.0
      %699 = vmatpush1.msra.mxu0 %v650
      %700 = vmatprep.subr.mxu0 0.0
      %701 = vmatpush1.msra.mxu0 %v651
      %702 = vmatprep.subr.mxu0 0.0
      %703 = vmatpush1.msra.mxu0 %v652
      %704 = vmatprep.subr.mxu0 0.0
      %705 = vmatpush1.msra.mxu0 %v653
      %706 = vmatprep.subr.mxu0 0.0
      %707 = vmatpush1.msra.mxu0 %v654
      %708 = vmatprep.subr.mxu0 0.0
      %709 = vmatpush1.msra.mxu0 %v655
      %710 = vmatprep.subr.mxu0 0.0
      %711 = vmatpush1.msra.mxu0 %v656
      %712 = vmatprep.subr.mxu0 0.0
      %713 = vmatpush1.msra.mxu0 %v657
      %714 = vmatprep.subr.mxu0 0.0
      %715 = vmatpush1.msra.mxu0 %v658
      %716 = vmatprep.subr.mxu0 0.0
      %717 = vmatpush1.msra.mxu0 %v659
      %718 = vmatprep.subr.mxu0 0.0
      %719 = vmatpush1.msra.mxu0 %v660
      %720 = vmatprep.subr.mxu0 0.0
      %721 = vmatpush1.msra.mxu0 %v661
      %722 = vmatprep.subr.mxu0 0.0
      %723 = vmatpush1.msra.mxu0 %v662
      %724 = vmatprep.subr.mxu0 0.0
      %725 = vmatpush1.msra.mxu0 %v663
      %726 = vmatprep.subr.mxu0 0.0
      %727 = vmatpush1.msra.mxu0 %v664
      %728 = vmatprep.subr.mxu0 0.0
      %729 = vmatpush1.msra.mxu0 %v665
      %730 = vmatprep.mubr.f32.mxu0 %v518
      %731 = vmatmul.mubr.f32.gmra.mrb[0].mxu0 %v516
      %v732 = vpop.f32.mrb[0].mxu0
      %v733 = vadd.f32 0.0, %v732
      %v734 = vpop.f32.mrb[0].mxu0
      %735 = vmatprep.mubr.f32.mxu0 %v524
      %736 = vmatmul.mubr.f32.gmra.mrb[0].mxu0 %v522
      %v737 = vpop.f32.mrb[0].mxu0
      %v738 = vadd.f32 0.0, %v737
      %v739 = vpop.f32.mrb[0].mxu0
      %740 = vdwg.mxu0
      %s741 = scalar_lea.vmem %s5, 512
      %v742 = vld [vmem:[%s741] sm:$0xff]
      %v743 = vld [vmem:[%s741 + $0x8] sm:$0xff]
      %v744 = vld [vmem:[%s741 + $0x10] sm:$0xff]
      %v745 = vld [vmem:[%s741 + $0x18] sm:$0xff]
      %v746 = vld [vmem:[%s741 + $0x20] sm:$0xff]
      %v747 = vld [vmem:[%s741 + $0x28] sm:$0xff]
      %v748 = vld [vmem:[%s741 + $0x30] sm:$0xff]
      %v749 = vld [vmem:[%s741 + $0x38] sm:$0xff]
      %v750 = vld [vmem:[%s741 + $0x40] sm:$0xff]
      %v751 = vld [vmem:[%s741 + $0x48] sm:$0xff]
      %v752 = vld [vmem:[%s741 + $0x50] sm:$0xff]
      %v753 = vld [vmem:[%s741 + $0x58] sm:$0xff]
      %v754 = vld [vmem:[%s741 + $0x60] sm:$0xff]
      %v755 = vld [vmem:[%s741 + $0x68] sm:$0xff]
      %v756 = vld [vmem:[%s741 + $0x70] sm:$0xff]
      %v757 = vld [vmem:[%s741 + $0x78] sm:$0xff]
      %v758 = vld [vmem:[%s741 + $0x80] sm:$0xff]
      %v759 = vld [vmem:[%s741 + $0x88] sm:$0xff]
      %v760 = vld [vmem:[%s741 + $0x90] sm:$0xff]
      %v761 = vld [vmem:[%s741 + $0x98] sm:$0xff]
      %v762 = vld [vmem:[%s741 + $0xa0] sm:$0xff]
      %v763 = vld [vmem:[%s741 + $0xa8] sm:$0xff]
      %v764 = vld [vmem:[%s741 + $0xb0] sm:$0xff]
      %v765 = vld [vmem:[%s741 + $0xb8] sm:$0xff]
      %v766 = vld [vmem:[%s741 + $0xc0] sm:$0xff]
      %v767 = vld [vmem:[%s741 + $0xc8] sm:$0xff]
      %v768 = vld [vmem:[%s741 + $0xd0] sm:$0xff]
      %v769 = vld [vmem:[%s741 + $0xd8] sm:$0xff]
      %v770 = vld [vmem:[%s741 + $0xe0] sm:$0xff]
      %v771 = vld [vmem:[%s741 + $0xe8] sm:$0xff]
      %v772 = vld [vmem:[%s741 + $0xf0] sm:$0xff]
      %v773 = vld [vmem:[%s741 + $0xf8] sm:$0xff]
      %774 = vmatprep.subr.mxu0 0.0
      %775 = vmatpush1.msra.mxu0 %v742
      %776 = vmatprep.subr.mxu0 0.0
      %777 = vmatpush1.msra.mxu0 %v743
      %778 = vmatprep.subr.mxu0 0.0
      %779 = vmatpush1.msra.mxu0 %v744
      %780 = vmatprep.subr.mxu0 0.0
      %781 = vmatpush1.msra.mxu0 %v745
      %782 = vmatprep.subr.mxu0 0.0
      %783 = vmatpush1.msra.mxu0 %v746
      %784 = vmatprep.subr.mxu0 0.0
      %785 = vmatpush1.msra.mxu0 %v747
      %786 = vmatprep.subr.mxu0 0.0
      %787 = vmatpush1.msra.mxu0 %v748
      %788 = vmatprep.subr.mxu0 0.0
      %789 = vmatpush1.msra.mxu0 %v749
      %790 = vmatprep.subr.mxu0 0.0
      %791 = vmatpush1.msra.mxu0 %v750
      %792 = vmatprep.subr.mxu0 0.0
      %793 = vmatpush1.msra.mxu0 %v751
      %794 = vmatprep.subr.mxu0 0.0
      %795 = vmatpush1.msra.mxu0 %v752
      %796 = vmatprep.subr.mxu0 0.0
      %797 = vmatpush1.msra.mxu0 %v753
      %798 = vmatprep.subr.mxu0 0.0
      %799 = vmatpush1.msra.mxu0 %v754
      %800 = vmatprep.subr.mxu0 0.0
      %801 = vmatpush1.msra.mxu0 %v755
      %802 = vmatprep.subr.mxu0 0.0
      %803 = vmatpush1.msra.mxu0 %v756
      %804 = vmatprep.subr.mxu0 0.0
      %805 = vmatpush1.msra.mxu0 %v757
      %806 = vmatprep.subr.mxu0 0.0
      %807 = vmatpush1.msra.mxu0 %v758
      %808 = vmatprep.subr.mxu0 0.0
      %809 = vmatpush1.msra.mxu0 %v759
      %810 = vmatprep.subr.mxu0 0.0
      %811 = vmatpush1.msra.mxu0 %v760
      %812 = vmatprep.subr.mxu0 0.0
      %813 = vmatpush1.msra.mxu0 %v761
      %814 = vmatprep.subr.mxu0 0.0
      %815 = vmatpush1.msra.mxu0 %v762
      %816 = vmatprep.subr.mxu0 0.0
      %817 = vmatpush1.msra.mxu0 %v763
      %818 = vmatprep.subr.mxu0 0.0
      %819 = vmatpush1.msra.mxu0 %v764
      %820 = vmatprep.subr.mxu0 0.0
      %821 = vmatpush1.msra.mxu0 %v765
      %822 = vmatprep.subr.mxu0 0.0
      %823 = vmatpush1.msra.mxu0 %v766
      %824 = vmatprep.subr.mxu0 0.0
      %825 = vmatpush1.msra.mxu0 %v767
      %826 = vmatprep.subr.mxu0 0.0
      %827 = vmatpush1.msra.mxu0 %v768
      %828 = vmatprep.subr.mxu0 0.0
      %829 = vmatpush1.msra.mxu0 %v769
      %830 = vmatprep.subr.mxu0 0.0
      %831 = vmatpush1.msra.mxu0 %v770
      %832 = vmatprep.subr.mxu0 0.0
      %833 = vmatpush1.msra.mxu0 %v771
      %834 = vmatprep.subr.mxu0 0.0
      %835 = vmatpush1.msra.mxu0 %v772
      %836 = vmatprep.subr.mxu0 0.0
      %837 = vmatpush1.msra.mxu0 %v773
      %838 = vmatprep.mubr.f32.mxu0 %v518
      %839 = vmatmul.mubr.f32.gmra.mrb[0].mxu0 %v516
      %v840 = vpop.f32.mrb[0].mxu0
      %v841 = vadd.f32 0.0, %v840
      %v842 = vpop.f32.mrb[0].mxu0
      %843 = vmatprep.mubr.f32.mxu0 %v524
      %844 = vmatmul.mubr.f32.gmra.mrb[0].mxu0 %v522
      %v845 = vpop.f32.mrb[0].mxu0
      %v846 = vadd.f32 0.0, %v845
      %v847 = vpop.f32.mrb[0].mxu0
      %848 = vdwg.mxu0
      %s849 = scalar_lea.vmem %s5, 768
      %v850 = vld [vmem:[%s849] sm:$0xff]
      %v851 = vld [vmem:[%s849 + $0x8] sm:$0xff]
      %v852 = vld [vmem:[%s849 + $0x10] sm:$0xff]
      %v853 = vld [vmem:[%s849 + $0x18] sm:$0xff]
      %v854 = vld [vmem:[%s849 + $0x20] sm:$0xff]
      %v855 = vld [vmem:[%s849 + $0x28] sm:$0xff]
      %v856 = vld [vmem:[%s849 + $0x30] sm:$0xff]
      %v857 = vld [vmem:[%s849 + $0x38] sm:$0xff]
      %v858 = vld [vmem:[%s849 + $0x40] sm:$0xff]
      %v859 = vld [vmem:[%s849 + $0x48] sm:$0xff]
      %v860 = vld [vmem:[%s849 + $0x50] sm:$0xff]
      %v861 = vld [vmem:[%s849 + $0x58] sm:$0xff]
      %v862 = vld [vmem:[%s849 + $0x60] sm:$0xff]
      %v863 = vld [vmem:[%s849 + $0x68] sm:$0xff]
      %v864 = vld [vmem:[%s849 + $0x70] sm:$0xff]
      %v865 = vld [vmem:[%s849 + $0x78] sm:$0xff]
      %v866 = vld [vmem:[%s849 + $0x80] sm:$0xff]
      %v867 = vld [vmem:[%s849 + $0x88] sm:$0xff]
      %v868 = vld [vmem:[%s849 + $0x90] sm:$0xff]
      %v869 = vld [vmem:[%s849 + $0x98] sm:$0xff]
      %v870 = vld [vmem:[%s849 + $0xa0] sm:$0xff]
      %v871 = vld [vmem:[%s849 + $0xa8] sm:$0xff]
      %v872 = vld [vmem:[%s849 + $0xb0] sm:$0xff]
      %v873 = vld [vmem:[%s849 + $0xb8] sm:$0xff]
      %v874 = vld [vmem:[%s849 + $0xc0] sm:$0xff]
      %v875 = vld [vmem:[%s849 + $0xc8] sm:$0xff]
      %v876 = vld [vmem:[%s849 + $0xd0] sm:$0xff]
      %v877 = vld [vmem:[%s849 + $0xd8] sm:$0xff]
      %v878 = vld [vmem:[%s849 + $0xe0] sm:$0xff]
      %v879 = vld [vmem:[%s849 + $0xe8] sm:$0xff]
      %v880 = vld [vmem:[%s849 + $0xf0] sm:$0xff]
      %v881 = vld [vmem:[%s849 + $0xf8] sm:$0xff]
      %882 = vmatprep.subr.mxu0 0.0
      %883 = vmatpush1.msra.mxu0 %v850
      %884 = vmatprep.subr.mxu0 0.0
      %885 = vmatpush1.msra.mxu0 %v851
      %886 = vmatprep.subr.mxu0 0.0
      %887 = vmatpush1.msra.mxu0 %v852
      %888 = vmatprep.subr.mxu0 0.0
      %889 = vmatpush1.msra.mxu0 %v853
      %890 = vmatprep.subr.mxu0 0.0
      %891 = vmatpush1.msra.mxu0 %v854
      %892 = vmatprep.subr.mxu0 0.0
      %893 = vmatpush1.msra.mxu0 %v855
      %894 = vmatprep.subr.mxu0 0.0
      %895 = vmatpush1.msra.mxu0 %v856
      %896 = vmatprep.subr.mxu0 0.0
      %897 = vmatpush1.msra.mxu0 %v857
      %898 = vmatprep.subr.mxu0 0.0
      %899 = vmatpush1.msra.mxu0 %v858
      %900 = vmatprep.subr.mxu0 0.0
      %901 = vmatpush1.msra.mxu0 %v859
      %902 = vmatprep.subr.mxu0 0.0
      %903 = vmatpush1.msra.mxu0 %v860
      %904 = vmatprep.subr.mxu0 0.0
      %905 = vmatpush1.msra.mxu0 %v861
      %906 = vmatprep.subr.mxu0 0.0
      %907 = vmatpush1.msra.mxu0 %v862
      %908 = vmatprep.subr.mxu0 0.0
      %909 = vmatpush1.msra.mxu0 %v863
      %910 = vmatprep.subr.mxu0 0.0
      %911 = vmatpush1.msra.mxu0 %v864
      %912 = vmatprep.subr.mxu0 0.0
      %913 = vmatpush1.msra.mxu0 %v865
      %914 = vmatprep.subr.mxu0 0.0
      %915 = vmatpush1.msra.mxu0 %v866
      %916 = vmatprep.subr.mxu0 0.0
      %917 = vmatpush1.msra.mxu0 %v867
      %918 = vmatprep.subr.mxu0 0.0
      %919 = vmatpush1.msra.mxu0 %v868
      %920 = vmatprep.subr.mxu0 0.0
      %921 = vmatpush1.msra.mxu0 %v869
      %922 = vmatprep.subr.mxu0 0.0
      %923 = vmatpush1.msra.mxu0 %v870
      %924 = vmatprep.subr.mxu0 0.0
      %925 = vmatpush1.msra.mxu0 %v871
      %926 = vmatprep.subr.mxu0 0.0
      %927 = vmatpush1.msra.mxu0 %v872
      %928 = vmatprep.subr.mxu0 0.0
      %929 = vmatpush1.msra.mxu0 %v873
      %930 = vmatprep.subr.mxu0 0.0
      %931 = vmatpush1.msra.mxu0 %v874
      %932 = vmatprep.subr.mxu0 0.0
      %933 = vmatpush1.msra.mxu0 %v875
      %934 = vmatprep.subr.mxu0 0.0
      %935 = vmatpush1.msra.mxu0 %v876
      %936 = vmatprep.subr.mxu0 0.0
      %937 = vmatpush1.msra.mxu0 %v877
      %938 = vmatprep.subr.mxu0 0.0
      %939 = vmatpush1.msra.mxu0 %v878
      %940 = vmatprep.subr.mxu0 0.0
      %941 = vmatpush1.msra.mxu0 %v879
      %942 = vmatprep.subr.mxu0 0.0
      %943 = vmatpush1.msra.mxu0 %v880
      %944 = vmatprep.subr.mxu0 0.0
      %945 = vmatpush1.msra.mxu0 %v881
      %946 = vmatprep.mubr.f32.mxu0 %v518
      %947 = vmatmul.mubr.f32.gmra.mrb[0].mxu0 %v516
      %v948 = vpop.f32.mrb[0].mxu0
      %v949 = vadd.f32 0.0, %v948
      %v950 = vpop.f32.mrb[0].mxu0
      %951 = vmatprep.mubr.f32.mxu0 %v524
      %952 = vmatmul.mubr.f32.gmra.mrb[0].mxu0 %v522
      %v953 = vpop.f32.mrb[0].mxu0
      %v954 = vadd.f32 0.0, %v953
      %v955 = vpop.f32.mrb[0].mxu0
      %956 = vdwg.mxu0
      %v957 = vmax.f32 %v625, %v733
      %v958 = vmax.f32 %v630, %v738
      %v959 = vmax.f32 %v841, %v949
      %v960 = vmax.f32 %v846, %v954
      %v961 = vmax.f32 %v957, %v959
      %v962 = vmax.f32 %v958, %v960
      %963 = vxpose.xlu0.b32.start [1/16] %v961, 128
      %964 = vxpose.xlu0.b32.cont [2/16] 0.0, 128
      %965 = vxpose.xlu0.b32.cont [3/16] 0.0, 128
      %966 = vxpose.xlu0.b32.cont [4/16] 0.0, 128
      %967 = vxpose.xlu0.b32.cont [5/16] 0.0, 128
      %968 = vxpose.xlu0.b32.cont [6/16] 0.0, 128
      %969 = vxpose.xlu0.b32.cont [7/16] 0.0, 128
      %970 = vxpose.xlu0.b32.cont [8/16] 0.0, 128
      %971 = vxpose.xlu0.b32.cont [9/16] 0.0, 128
      %972 = vxpose.xlu0.b32.cont [10/16] 0.0, 128
      %973 = vxpose.xlu0.b32.cont [11/16] 0.0, 128
      %974 = vxpose.xlu0.b32.cont [12/16] 0.0, 128
      %975 = vxpose.xlu0.b32.cont [13/16] 0.0, 128
      %976 = vxpose.xlu0.b32.cont [14/16] 0.0, 128
      %977 = vxpose.xlu0.b32.cont [15/16] 0.0, 128
      %978 = vxpose.xlu0.b32.end [16/16] 0.0, 128
      %v979 = vpop.trf.xlu0
      %v980 = vpop.trf.xlu0
      %v981 = vpop.trf.xlu0
      %v982 = vpop.trf.xlu0
      %v983 = vpop.trf.xlu0
      %v984 = vpop.trf.xlu0
      %v985 = vpop.trf.xlu0
      %v986 = vpop.trf.xlu0
      %v987 = vpop.trf.xlu0
      %v988 = vpop.trf.xlu0
      %v989 = vpop.trf.xlu0
      %v990 = vpop.trf.xlu0
      %v991 = vpop.trf.xlu0
      %v992 = vpop.trf.xlu0
      %v993 = vpop.trf.xlu0
      %v994 = vpop.trf.xlu0
      %vm995 = vcmask 64512
      %v997 = vsel %vm995, %v979, 0
      %v1000 = vsel %vm995, %v980, 0
      %v1003 = vsel %vm995, %v981, 0
      %v1006 = vsel %vm995, %v982, 0
      %v1009 = vsel %vm995, %v983, 0
      %v1012 = vsel %vm995, %v984, 0
      %v1015 = vsel %vm995, %v985, 0
      %v1018 = vsel %vm995, %v986, 0
      %1020 = vmatprep.subr.mxu0 %v512
      %1021 = vmatpush1.msra.mxu0 %v510
      %1022 = vmatprep.subr.mxu0 0.0
      %1023 = vmatpush1.msra.mxu0 0.0
      %1024 = vmatprep.subr.mxu0 0.0
      %1025 = vmatpush1.msra.mxu0 0.0
      %1026 = vmatprep.subr.mxu0 0.0
      %1027 = vmatpush1.msra.mxu0 0.0
      %1028 = vmatprep.subr.mxu0 0.0
      %1029 = vmatpush1.msra.mxu0 0.0
      %1030 = vmatprep.subr.mxu0 0.0
      %1031 = vmatpush1.msra.mxu0 0.0
      %1032 = vmatprep.subr.mxu0 0.0
      %1033 = vmatpush1.msra.mxu0 0.0
      %1034 = vmatprep.subr.mxu0 0.0
      %1035 = vmatpush1.msra.mxu0 0.0
      %1036 = vmatprep.subr.mxu0 0.0
      %1037 = vmatpush1.msra.mxu0 0.0
      %1038 = vmatprep.subr.mxu0 0.0
      %1039 = vmatpush1.msra.mxu0 0.0
      %1040 = vmatprep.subr.mxu0 0.0
      %1041 = vmatpush1.msra.mxu0 0.0
      %1042 = vmatprep.subr.mxu0 0.0
      %1043 = vmatpush1.msra.mxu0 0.0
      %1044 = vmatprep.subr.mxu0 0.0
      %1045 = vmatpush1.msra.mxu0 0.0
      %1046 = vmatprep.subr.mxu0 0.0
      %1047 = vmatpush1.msra.mxu0 0.0
      %1048 = vmatprep.subr.mxu0 0.0
      %1049 = vmatpush1.msra.mxu0 0.0
      %1050 = vmatprep.subr.mxu0 0.0
      %1051 = vmatpush1.msra.mxu0 0.0
      %1052 = vmatprep.subr.mxu0 0.0
      %1053 = vmatpush1.msra.mxu0 0.0
      %1054 = vmatprep.subr.mxu0 0.0
      %1055 = vmatpush1.msra.mxu0 0.0
      %1056 = vmatprep.subr.mxu0 0.0
      %1057 = vmatpush1.msra.mxu0 0.0
      %1058 = vmatprep.subr.mxu0 0.0
      %1059 = vmatpush1.msra.mxu0 0.0
      %1060 = vmatprep.subr.mxu0 0.0
      %1061 = vmatpush1.msra.mxu0 0.0
      %1062 = vmatprep.subr.mxu0 0.0
      %1063 = vmatpush1.msra.mxu0 0.0
      %1064 = vmatprep.subr.mxu0 0.0
      %1065 = vmatpush1.msra.mxu0 0.0
      %1066 = vmatprep.subr.mxu0 0.0
      %1067 = vmatpush1.msra.mxu0 0.0
      %1068 = vmatprep.subr.mxu0 0.0
      %1069 = vmatpush1.msra.mxu0 0.0
      %1070 = vmatprep.subr.mxu0 0.0
      %1071 = vmatpush1.msra.mxu0 0.0
      %1072 = vmatprep.subr.mxu0 0.0
      %1073 = vmatpush1.msra.mxu0 0.0
      %1074 = vmatprep.subr.mxu0 0.0
      %1075 = vmatpush1.msra.mxu0 0.0
      %1076 = vmatprep.subr.mxu0 0.0
      %1077 = vmatpush1.msra.mxu0 0.0
      %1078 = vmatprep.subr.mxu0 0.0
      %1079 = vmatpush1.msra.mxu0 0.0
      %1080 = vmatprep.subr.mxu0 0.0
      %1081 = vmatpush1.msra.mxu0 0.0
      %1082 = vmatprep.subr.mxu0 0.0
      %1083 = vmatpush1.msra.mxu0 0.0
      %1084 = vmatprep.mubr.f32.mxu0 0.0
      %1085 = vmatmul.mubr.f32.gmra.mrb[0].mxu0 %v997
      %v1086 = vpop.f32.mrb[0].mxu0
      %v1087 = vadd.f32 0.0, %v1086
      %v1088 = vpop.f32.mrb[0].mxu0
      %v1089 = vadd.f32 0.0, %v1088
      %1090 = vmatprep.mubr.f32.mxu0 0.0
      %1091 = vmatmul.mubr.f32.gmra.mrb[0].mxu0 %v1000
      %v1092 = vpop.f32.mrb[0].mxu0
      %v1093 = vadd.f32 0.0, %v1092
      %v1094 = vpop.f32.mrb[0].mxu0
      %v1095 = vadd.f32 0.0, %v1094
      %1096 = vmatprep.mubr.f32.mxu0 0.0
      %1097 = vmatmul.mubr.f32.gmra.mrb[0].mxu0 %v1003
      %v1098 = vpop.f32.mrb[0].mxu0
      %v1099 = vadd.f32 0.0, %v1098
      %v1100 = vpop.f32.mrb[0].mxu0
      %v1101 = vadd.f32 0.0, %v1100
      %1102 = vmatprep.mubr.f32.mxu0 0.0
      %1103 = vmatmul.mubr.f32.gmra.mrb[0].mxu0 %v1006
      %v1104 = vpop.f32.mrb[0].mxu0
      %v1105 = vadd.f32 0.0, %v1104
      %v1106 = vpop.f32.mrb[0].mxu0
      %v1107 = vadd.f32 0.0, %v1106
      %1108 = vmatprep.mubr.f32.mxu0 0.0
      %1109 = vmatmul.mubr.f32.gmra.mrb[0].mxu0 %v1009
      %v1110 = vpop.f32.mrb[0].mxu0
      %v1111 = vadd.f32 0.0, %v1110
      %v1112 = vpop.f32.mrb[0].mxu0
      %v1113 = vadd.f32 0.0, %v1112
      %1114 = vmatprep.mubr.f32.mxu0 0.0
      %1115 = vmatmul.mubr.f32.gmra.mrb[0].mxu0 %v1012
      %v1116 = vpop.f32.mrb[0].mxu0
      %v1117 = vadd.f32 0.0, %v1116
      %v1118 = vpop.f32.mrb[0].mxu0
      %v1119 = vadd.f32 0.0, %v1118
      %1120 = vmatprep.mubr.f32.mxu0 0.0
      %1121 = vmatmul.mubr.f32.gmra.mrb[0].mxu0 %v1015
      %v1122 = vpop.f32.mrb[0].mxu0
      %v1123 = vadd.f32 0.0, %v1122
      %v1124 = vpop.f32.mrb[0].mxu0
      %v1125 = vadd.f32 0.0, %v1124
      %1126 = vmatprep.mubr.f32.mxu0 0.0
      %1127 = vmatmul.mubr.f32.gmra.mrb[0].mxu0 %v1018
      %v1128 = vpop.f32.mrb[0].mxu0
      %v1129 = vadd.f32 0.0, %v1128
      %v1130 = vpop.f32.mrb[0].mxu0
      %v1131 = vadd.f32 0.0, %v1130
      %1132 = vdwg.mxu0
      %v1133 = vmax.f32 %v1087, %v1099
      %v1134 = vmax.f32 %v1093, %v1105
      %v1135 = vmax.f32 %v1133, %v1111
      %v1136 = vmax.f32 %v1134, %v1117
      %v1137 = vmax.f32 %v1135, %v1123
      %v1138 = vmax.f32 %v1136, %v1129
      %v1139 = vmax.f32 %v1137, %v1138
      %v1140 = vrot.slane %v1139, 4
      %v1141 = vmax.f32 %v1139, %v1140
      %v1142 = vrot.slane %v1141, 2
      %v1143 = vmax.f32 %v1141, %v1142
      %v1144 = vrot.slane %v1143, 1
      %v1145 = vmax.f32 %v1143, %v1144
      %v1146 = vmax.f32 %v1089, %v1101
      %v1147 = vmax.f32 %v1095, %v1107
      %v1148 = vmax.f32 %v1146, %v1113
      %v1149 = vmax.f32 %v1147, %v1119
      %v1150 = vmax.f32 %v1148, %v1125
      %v1151 = vmax.f32 %v1149, %v1131
      %v1152 = vmax.f32 %v1150, %v1151
      %v1153 = vrot.slane %v1152, 4
      %v1154 = vmax.f32 %v1152, %v1153
      %v1155 = vrot.slane %v1154, 2
      %v1156 = vmax.f32 %v1154, %v1155
      %v1157 = vrot.slane %v1156, 1
      %v1158 = vmax.f32 %v1156, %v1157
      %v1159 = vsub.f32 %v1087, %v1145
      %v1160 = vsub.f32 %v1089, %v1158
      %v1161 = vsub.f32 %v1093, %v1145
      %v1162 = vsub.f32 %v1095, %v1158
      %v1163 = vsub.f32 %v1099, %v1145
      %v1164 = vsub.f32 %v1101, %v1158
      %v1165 = vsub.f32 %v1105, %v1145
      %v1166 = vsub.f32 %v1107, %v1158
      %v1167 = vsub.f32 %v1111, %v1145
      %v1168 = vsub.f32 %v1113, %v1158
      %v1169 = vsub.f32 %v1117, %v1145
      %v1170 = vsub.f32 %v1119, %v1158
      %v1171 = vsub.f32 %v1123, %v1145
      %v1172 = vsub.f32 %v1125, %v1158
      %v1173 = vsub.f32 %v1129, %v1145
      %v1174 = vsub.f32 %v1131, %v1158
      %v1175 = vmul.f32 %v1159, 1.442695
      %v1176 = vpow.pop %v1175
      %v1177 = vmul.f32 %v1160, 1.442695
      %v1178 = vpow.pop %v1177
      %v1179 = vmul.f32 %v1161, 1.442695
      %v1180 = vpow.pop %v1179
      %v1181 = vmul.f32 %v1162, 1.442695
      %v1182 = vpow.pop %v1181
      %v1183 = vmul.f32 %v1163, 1.442695
      %v1184 = vpow.pop %v1183
      %v1185 = vmul.f32 %v1164, 1.442695
      %v1186 = vpow.pop %v1185
      %v1187 = vmul.f32 %v1165, 1.442695
      %v1188 = vpow.pop %v1187
      %v1189 = vmul.f32 %v1166, 1.442695
      %v1190 = vpow.pop %v1189
      %v1191 = vmul.f32 %v1167, 1.442695
      %v1192 = vpow.pop %v1191
      %v1193 = vmul.f32 %v1168, 1.442695
      %v1194 = vpow.pop %v1193
      %v1195 = vmul.f32 %v1169, 1.442695
      %v1196 = vpow.pop %v1195
      %v1197 = vmul.f32 %v1170, 1.442695
      %v1198 = vpow.pop %v1197
      %v1199 = vmul.f32 %v1171, 1.442695
      %v1200 = vpow.pop %v1199
      %v1201 = vmul.f32 %v1172, 1.442695
      %v1202 = vpow.pop %v1201
      %v1203 = vmul.f32 %v1173, 1.442695
      %v1204 = vpow.pop %v1203
      %v1205 = vmul.f32 %v1174, 1.442695
      %v1206 = vpow.pop %v1205
      %v1207 = vadd.f32 %v1176, %v1180
      %v1208 = vadd.f32 %v1207, %v1184
      %v1209 = vadd.f32 %v1208, %v1188
      %v1210 = vadd.f32 %v1209, %v1192
      %v1211 = vadd.f32 %v1210, %v1196
      %v1212 = vadd.f32 %v1211, %v1200
      %v1213 = vadd.f32 %v1212, %v1204
      %v1214 = vrot.slane %v1213, 4
      %v1215 = vadd.f32 %v1213, %v1214
      %v1216 = vrot.slane %v1215, 2
      %v1217 = vadd.f32 %v1215, %v1216
      %v1218 = vrot.slane %v1217, 1
      %v1219 = vadd.f32 %v1217, %v1218
      %v1220 = vadd.f32 %v1178, %v1182
      %v1221 = vadd.f32 %v1220, %v1186
      %v1222 = vadd.f32 %v1221, %v1190
      %v1223 = vadd.f32 %v1222, %v1194
      %v1224 = vadd.f32 %v1223, %v1198
      %v1225 = vadd.f32 %v1224, %v1202
      %v1226 = vadd.f32 %v1225, %v1206
      %v1227 = vrot.slane %v1226, 4
      %v1228 = vadd.f32 %v1226, %v1227
      %v1229 = vrot.slane %v1228, 2
      %v1230 = vadd.f32 %v1228, %v1229
      %v1231 = vrot.slane %v1230, 1
      %v1232 = vadd.f32 %v1230, %v1231
      %v1233 = vrcp.pop %v1219
      %v1234 = vrcp.pop %v1232
      %v1235 = vmul.f32 %v1176, %v1233
      %v1236 = vmul.f32 %v1178, %v1234
      %v1237 = vmul.f32 %v1180, %v1233
      %v1238 = vmul.f32 %v1182, %v1234
      %v1239 = vmul.f32 %v1184, %v1233
      %v1240 = vmul.f32 %v1186, %v1234
      %v1241 = vmul.f32 %v1188, %v1233
      %v1242 = vmul.f32 %v1190, %v1234
      %v1243 = vmul.f32 %v1192, %v1233
      %v1244 = vmul.f32 %v1194, %v1234
      %v1245 = vmul.f32 %v1196, %v1233
      %v1246 = vmul.f32 %v1198, %v1234
      %v1247 = vmul.f32 %v1200, %v1233
      %v1248 = vmul.f32 %v1202, %v1234
      %v1249 = vmul.f32 %v1204, %v1233
      %v1250 = vmul.f32 %v1206, %v1234
      %vm1251 = vcmask 523264
      %v1253 = vsel %vm1251, %v962, 0
      %1255 = vmatprep.subr.mxu0 %v1236
      %1256 = vmatpush1.msra.mxu0 %v1235
      %1257 = vmatprep.subr.mxu0 %v1238
      %1258 = vmatpush1.msra.mxu0 %v1237
      %1259 = vmatprep.subr.mxu0 %v1240
      %1260 = vmatpush1.msra.mxu0 %v1239
      %1261 = vmatprep.subr.mxu0 %v1242
      %1262 = vmatpush1.msra.mxu0 %v1241
      %1263 = vmatprep.subr.mxu0 %v1244
      %1264 = vmatpush1.msra.mxu0 %v1243
      %1265 = vmatprep.subr.mxu0 %v1246
      %1266 = vmatpush1.msra.mxu0 %v1245
      %1267 = vmatprep.subr.mxu0 %v1248
      %1268 = vmatpush1.msra.mxu0 %v1247
      %1269 = vmatprep.subr.mxu0 %v1250
      %1270 = vmatpush1.msra.mxu0 %v1249
      %1271 = vmatprep.subr.mxu0 0.0
      %1272 = vmatpush1.msra.mxu0 0.0
      %1273 = vmatprep.subr.mxu0 0.0
      %1274 = vmatpush1.msra.mxu0 0.0
      %1275 = vmatprep.subr.mxu0 0.0
      %1276 = vmatpush1.msra.mxu0 0.0
      %1277 = vmatprep.subr.mxu0 0.0
      %1278 = vmatpush1.msra.mxu0 0.0
      %1279 = vmatprep.subr.mxu0 0.0
      %1280 = vmatpush1.msra.mxu0 0.0
      %1281 = vmatprep.subr.mxu0 0.0
      %1282 = vmatpush1.msra.mxu0 0.0
      %1283 = vmatprep.subr.mxu0 0.0
      %1284 = vmatpush1.msra.mxu0 0.0
      %1285 = vmatprep.subr.mxu0 0.0
      %1286 = vmatpush1.msra.mxu0 0.0
      %1287 = vmatprep.subr.mxu0 0.0
      %1288 = vmatpush1.msra.mxu0 0.0
      %1289 = vmatprep.subr.mxu0 0.0
      %1290 = vmatpush1.msra.mxu0 0.0
      %1291 = vmatprep.subr.mxu0 0.0
      %1292 = vmatpush1.msra.mxu0 0.0
      %1293 = vmatprep.subr.mxu0 0.0
      %1294 = vmatpush1.msra.mxu0 0.0
      %1295 = vmatprep.subr.mxu0 0.0
      %1296 = vmatpush1.msra.mxu0 0.0
      %1297 = vmatprep.subr.mxu0 0.0
      %1298 = vmatpush1.msra.mxu0 0.0
      %1299 = vmatprep.subr.mxu0 0.0
      %1300 = vmatpush1.msra.mxu0 0.0
      %1301 = vmatprep.subr.mxu0 0.0
      %1302 = vmatpush1.msra.mxu0 0.0
      %1303 = vmatprep.subr.mxu0 0.0
      %1304 = vmatpush1.msra.mxu0 0.0
      %1305 = vmatprep.subr.mxu0 0.0
      %1306 = vmatpush1.msra.mxu0 0.0
      %1307 = vmatprep.subr.mxu0 0.0
      %1308 = vmatpush1.msra.mxu0 0.0
      %1309 = vmatprep.subr.mxu0 0.0
      %1310 = vmatpush1.msra.mxu0 0.0
      %1311 = vmatprep.subr.mxu0 0.0
      %1312 = vmatpush1.msra.mxu0 0.0
      %1313 = vmatprep.subr.mxu0 0.0
      %1314 = vmatpush1.msra.mxu0 0.0
      %1315 = vmatprep.subr.mxu0 0.0
      %1316 = vmatpush1.msra.mxu0 0.0
      %1317 = vmatprep.subr.mxu0 0.0
      %1318 = vmatpush1.msra.mxu0 0.0
      %1319 = vmatprep.mubr.f32.mxu0 0.0
      %1320 = vmatmul.mubr.f32.gmra.mrb[0].mxu0 %v1253
      %v1321 = vpop.f32.mrb[0].mxu0
      %v1322 = vadd.f32 0.0, %v1321
      %v1323 = vpop.f32.mrb[0].mxu0
      %v1324 = vadd.f32 0.0, %v1323
      %1325 = vdwg.mxu0
      %v1326 = vld [vmem:[%s6] sm:$0xff]
      %v1327 = vld [vmem:[%s6 + $0x8] sm:$0xff]
      %v1328 = vld [vmem:[%s7] sm:$0xff]
      %v1329 = vld [vmem:[%s7 + $0x8] sm:$0xff]
      %1331 = vset.pattern.permute.xlu0 0
      %1332 = vperm.xlu0 %1331, %v1328
      %v1333 = vpop.permute.xlu0 %1332
      %1336 = vset.pattern.permute.xlu0 0
      %1337 = vperm.xlu0 %1336, %v1329
      %v1338 = vpop.permute.xlu0 %1337
      %v1341 = vsel %vm995, %v1326, 0
      %v1344 = vsel %vm995, %v1327, 0
      %1346 = vmatprep.subr.mxu0 %v1324
      %1347 = vmatpush1.msra.mxu0 %v1322
      %1348 = vmatprep.subr.mxu0 0.0
      %1349 = vmatpush1.msra.mxu0 0.0
      %1350 = vmatprep.subr.mxu0 0.0
      %1351 = vmatpush1.msra.mxu0 0.0
      %1352 = vmatprep.subr.mxu0 0.0
      %1353 = vmatpush1.msra.mxu0 0.0
      %1354 = vmatprep.subr.mxu0 0.0
      %1355 = vmatpush1.msra.mxu0 0.0
      %1356 = vmatprep.subr.mxu0 0.0
      %1357 = vmatpush1.msra.mxu0 0.0
      %1358 = vmatprep.subr.mxu0 0.0
      %1359 = vmatpush1.msra.mxu0 0.0
      %1360 = vmatprep.subr.mxu0 0.0
      %1361 = vmatpush1.msra.mxu0 0.0
      %1362 = vmatprep.subr.mxu0 0.0
      %1363 = vmatpush1.msra.mxu0 0.0
      %1364 = vmatprep.subr.mxu0 0.0
      %1365 = vmatpush1.msra.mxu0 0.0
      %1366 = vmatprep.subr.mxu0 0.0
      %1367 = vmatpush1.msra.mxu0 0.0
      %1368 = vmatprep.subr.mxu0 0.0
      %1369 = vmatpush1.msra.mxu0 0.0
      %1370 = vmatprep.subr.mxu0 0.0
      %1371 = vmatpush1.msra.mxu0 0.0
      %1372 = vmatprep.subr.mxu0 0.0
      %1373 = vmatpush1.msra.mxu0 0.0
      %1374 = vmatprep.subr.mxu0 0.0
      %1375 = vmatpush1.msra.mxu0 0.0
      %1376 = vmatprep.subr.mxu0 0.0
      %1377 = vmatpush1.msra.mxu0 0.0
      %1378 = vmatprep.subr.mxu0 0.0
      %1379 = vmatpush1.msra.mxu0 0.0
      %1380 = vmatprep.subr.mxu0 0.0
      %1381 = vmatpush1.msra.mxu0 0.0
      %1382 = vmatprep.subr.mxu0 0.0
      %1383 = vmatpush1.msra.mxu0 0.0
      %1384 = vmatprep.subr.mxu0 0.0
      %1385 = vmatpush1.msra.mxu0 0.0
      %1386 = vmatprep.subr.mxu0 0.0
      %1387 = vmatpush1.msra.mxu0 0.0
      %1388 = vmatprep.subr.mxu0 0.0
      %1389 = vmatpush1.msra.mxu0 0.0
      %1390 = vmatprep.subr.mxu0 0.0
      %1391 = vmatpush1.msra.mxu0 0.0
      %1392 = vmatprep.subr.mxu0 0.0
      %1393 = vmatpush1.msra.mxu0 0.0
      %1394 = vmatprep.subr.mxu0 0.0
      %1395 = vmatpush1.msra.mxu0 0.0
      %1396 = vmatprep.subr.mxu0 0.0
      %1397 = vmatpush1.msra.mxu0 0.0
      %1398 = vmatprep.subr.mxu0 0.0
      %1399 = vmatpush1.msra.mxu0 0.0
      %1400 = vmatprep.subr.mxu0 0.0
      %1401 = vmatpush1.msra.mxu0 0.0
      %1402 = vmatprep.subr.mxu0 0.0
      %1403 = vmatpush1.msra.mxu0 0.0
      %1404 = vmatprep.subr.mxu0 0.0
      %1405 = vmatpush1.msra.mxu0 0.0
      %1406 = vmatprep.subr.mxu0 0.0
      %1407 = vmatpush1.msra.mxu0 0.0
      %1408 = vmatprep.subr.mxu0 0.0
      %1409 = vmatpush1.msra.mxu0 0.0
      %1410 = vmatprep.mubr.f32.mxu0 0.0
      %1411 = vmatmul.mubr.f32.gmra.mrb[0].mxu0 %v1341
      %v1412 = vpop.f32.mrb[0].mxu0
      %v1413 = vadd.f32 %v1333, %v1412
      %v1414 = vpop.f32.mrb[0].mxu0
      %v1415 = vadd.f32 %v1333, %v1414
      %1416 = vmatprep.mubr.f32.mxu0 0.0
      %1417 = vmatmul.mubr.f32.gmra.mrb[0].mxu0 %v1344
      %v1418 = vpop.f32.mrb[0].mxu0
      %v1419 = vadd.f32 %v1338, %v1418
      %v1420 = vpop.f32.mrb[0].mxu0
      %v1421 = vadd.f32 %v1338, %v1420
      %1422 = vdwg.mxu0
      %v1423 = vadd.f32 %v1413, %v404
      %v1424 = vadd.f32 %v1415, %v405
      %v1425 = vadd.f32 %v1419, %v406
      %v1426 = vadd.f32 %v1421, %v407
      %v1427 = vadd.f32 %v400, %v401
      %1428 = vadd.xlane.f32.xlu0 %v1427
      %v1429 = vpop.xlane.xlu0 %1428
      %v1430 = vadd.f32 %v402, %v403
      %1431 = vadd.xlane.f32.xlu0 %v1430
      %v1432 = vpop.xlane.xlu0 %1431
      %v1433 = vadd.f32 %v1423, %v1424
      %1434 = vadd.xlane.f32.xlu0 %v1433
      %v1435 = vpop.xlane.xlu0 %1434
      %v1436 = vadd.f32 %v1425, %v1426
      %1437 = vadd.xlane.f32.xlu0 %v1436
      %v1438 = vpop.xlane.xlu0 %1437
      %v1439 = vadd.f32 %v408, %v409
      %1440 = vadd.xlane.f32.xlu0 %v1439
      %v1441 = vpop.xlane.xlu0 %1440
      %v1442 = vadd.f32 %v410, %v411
      %1443 = vadd.xlane.f32.xlu0 %v1442
      %v1444 = vpop.xlane.xlu0 %1443
      %v1445 = vmul.f32 %v1429, 0.00390625
      %v1446 = vmul.f32 %v1432, 0.00390625
      %v1447 = vmul.f32 %v1435, 0.00390625
      %v1448 = vmul.f32 %v1438, 0.00390625
      %v1449 = vmul.f32 %v1441, 0.00390625
      %v1450 = vmul.f32 %v1444, 0.00390625
      %v1451 = vld [vmem:[%s8] sm:$0xff]
      %v1452 = vld [vmem:[%s8 + $0x8] sm:$0xff]
      %v1453 = vld [vmem:[%s8 + $0x10] sm:$0xff]
      %v1454 = vld [vmem:[%s8 + $0x18] sm:$0xff]
      %v1455 = vld [vmem:[%s8 + $0x20] sm:$0xff]
      %v1456 = vld [vmem:[%s8 + $0x28] sm:$0xff]
      %v1457 = vmul.f32 %v1451, %v1445
      %v1458 = vmul.f32 %v1452, %v1446
      %v1459 = vmul.f32 %v1453, %v1447
      %v1460 = vmul.f32 %v1454, %v1448
      %v1461 = vmul.f32 %v1455, %v1449
      %v1462 = vmul.f32 %v1456, %v1450
      %vm1463 = vcmask 23552
      %v1464 = vsel %vm1463, %v1457, 0.0
      %v1465 = vsel %vm1463, %v1458, 0.0
      %v1466 = vadd.f32 %v1464, %v1465
      %v1467 = vsel %vm1463, %v1459, 0.0
      %v1468 = vadd.f32 %v1466, %v1467
      %v1469 = vsel %vm1463, %v1460, 0.0
      %v1470 = vadd.f32 %v1468, %v1469
      %v1471 = vsel %vm1463, %v1461, 0.0
      %v1472 = vadd.f32 %v1470, %v1471
      %v1473 = vsel %vm1463, %v1462, 0.0
      %v1474 = vadd.f32 %v1472, %v1473
      %v1475 = vrot.slane %v1474, 4
      %v1476 = vadd.f32 %v1474, %v1475
      %v1477 = vrot.slane %v1476, 2
      %v1478 = vadd.f32 %v1476, %v1477
      %v1479 = vrot.slane %v1478, 1
      %v1480 = vadd.f32 %v1478, %v1479
      %v1481 = vmax.f32 %v1480, 0.0
      %v1482 = vld [vmem:[%s9] sm:$0xff]
      %v1483 = vld [vmem:[%s9 + $0x8] sm:$0xff]
      %v1484 = vld [vmem:[%s9 + $0x10] sm:$0xff]
      %v1485 = vld [vmem:[%s9 + $0x18] sm:$0xff]
      %v1486 = vld [vmem:[%s9 + $0x20] sm:$0xff]
      %v1487 = vld [vmem:[%s9 + $0x28] sm:$0xff]
      %v1488 = vmul.f32 %v1482, %v1481
      %v1489 = vmul.f32 %v1483, %v1481
      %v1490 = vmul.f32 %v1484, %v1481
      %v1491 = vmul.f32 %v1485, %v1481
      %v1492 = vmul.f32 %v1486, %v1481
      %v1493 = vmul.f32 %v1487, %v1481
      %v1494 = vsel %vm1463, %v1488, 0.0
      %1495 = vadd.xlane.f32.xlu0 %v1494
      %v1496 = vpop.xlane.xlu0 %1495
      %v1497 = vsel %vm1463, %v1489, 0.0
      %1498 = vadd.xlane.f32.xlu0 %v1497
      %v1499 = vpop.xlane.xlu0 %1498
      %v1500 = vsel %vm1463, %v1490, 0.0
      %1501 = vadd.xlane.f32.xlu0 %v1500
      %v1502 = vpop.xlane.xlu0 %1501
      %v1503 = vsel %vm1463, %v1491, 0.0
      %1504 = vadd.xlane.f32.xlu0 %v1503
      %v1505 = vpop.xlane.xlu0 %1504
      %v1506 = vsel %vm1463, %v1492, 0.0
      %1507 = vadd.xlane.f32.xlu0 %v1506
      %v1508 = vpop.xlane.xlu0 %1507
      %v1509 = vsel %vm1463, %v1493, 0.0
      %1510 = vadd.xlane.f32.xlu0 %v1509
      %v1511 = vpop.xlane.xlu0 %1510
      %v1512 = vxor.u32 %v1496, 2147483648
      %v1513 = vxor.u32 %v1499, 2147483648
      %v1514 = vxor.u32 %v1502, 2147483648
      %v1515 = vxor.u32 %v1505, 2147483648
      %v1516 = vxor.u32 %v1508, 2147483648
      %v1517 = vxor.u32 %v1511, 2147483648
      %v1518 = vmul.f32 %v1512, 1.442695
      %v1519 = vpow.pop %v1518
      %v1520 = vmul.f32 %v1513, 1.442695
      %v1521 = vpow.pop %v1520
      %v1522 = vmul.f32 %v1514, 1.442695
      %v1523 = vpow.pop %v1522
      %v1524 = vmul.f32 %v1515, 1.442695
      %v1525 = vpow.pop %v1524
      %v1526 = vmul.f32 %v1516, 1.442695
      %v1527 = vpow.pop %v1526
      %v1528 = vmul.f32 %v1517, 1.442695
      %v1529 = vpow.pop %v1528
      %v1530 = vadd.f32 %v1519, 1.0
      %v1531 = vadd.f32 %v1521, 1.0
      %v1532 = vadd.f32 %v1523, 1.0
      %v1533 = vadd.f32 %v1525, 1.0
      %v1534 = vadd.f32 %v1527, 1.0
      %v1535 = vadd.f32 %v1529, 1.0
      %v1536 = vrcp.pop %v1530
      %v1537 = vmul.f32 1.0, %v1536
      %v1538 = vrcp.pop %v1531
      %v1539 = vmul.f32 1.0, %v1538
      %v1540 = vrcp.pop %v1532
      %v1541 = vmul.f32 1.0, %v1540
      %v1542 = vrcp.pop %v1533
      %v1543 = vmul.f32 1.0, %v1542
      %v1544 = vrcp.pop %v1534
      %v1545 = vmul.f32 1.0, %v1544
      %v1546 = vrcp.pop %v1535
      %v1547 = vmul.f32 1.0, %v1546
      %v1548 = vmul.f32 %v400, %v1537
      %v1549 = vmul.f32 %v401, %v1537
      %v1550 = vmul.f32 %v402, %v1539
      %v1551 = vmul.f32 %v403, %v1539
      %v1552 = vmul.f32 %v1423, %v1541
      %v1553 = vmul.f32 %v1424, %v1541
      %v1554 = vmul.f32 %v1425, %v1543
      %v1555 = vmul.f32 %v1426, %v1543
      %v1556 = vmul.f32 %v408, %v1545
      %v1557 = vmul.f32 %v409, %v1545
      %v1558 = vmul.f32 %v410, %v1547
      %v1559 = vmul.f32 %v411, %v1547
      %1560 = vst [vmem:[%s399] sm:$0xff] %v1548
      %1561 = vst [vmem:[%s399 + $0x8] sm:$0xff] %v1549
      %1562 = vst [vmem:[%s399 + $0x10] sm:$0xff] %v1550
      %1563 = vst [vmem:[%s399 + $0x18] sm:$0xff] %v1551
      %1564 = vst [vmem:[%s399 + $0x20] sm:$0xff] %v1552
      %1565 = vst [vmem:[%s399 + $0x28] sm:$0xff] %v1553
      %1566 = vst [vmem:[%s399 + $0x30] sm:$0xff] %v1554
      %1567 = vst [vmem:[%s399 + $0x38] sm:$0xff] %v1555
      %1568 = vst [vmem:[%s399 + $0x40] sm:$0xff] %v1556
      %1569 = vst [vmem:[%s399 + $0x48] sm:$0xff] %v1557
      %1570 = vst [vmem:[%s399 + $0x50] sm:$0xff] %v1558
      %1571 = vst [vmem:[%s399 + $0x58] sm:$0xff] %v1559
      %p1572 = scmp.lt.s32.totalorder %s21, 1
      %s1573 = scalar_select %p1572, %s21, 1
      %s1574 = smul.addr %s1573, 12
      %s1575 = smul.addr %s1574, 8
      %s1576 = scalar_lea.vmem %s10, %s1575
      // Predicated region
      $region61: #{asm_forward.1} parent=59 // pred_check
        %p1577 = pneg %p264
      $region62: #{asm_forward.1} parent=59 // pred_check_branch
        %1579 = sbr.rel (%p1577) target = $region64
      $region63: #{asm_forward.1} parent=59 // pred_region
        _
      $region64: #{asm_forward.1} parent=59 // pred_fallthru
        _
    $region60: #{asm_forward.1} parent=5 // pred_fallthru
      _
    %p1580 = scmp.le.s32.totalorder 2, %s16
    // Predicated region
    $region65: #{asm_forward.1} parent=5 // pred_check
      %p1581 = pneg %p1580
    $region66: #{asm_forward.1} parent=5 // pred_check_branch
      %1583 = sbr.rel (%p1581) target = $region68
    $region67: #{asm_forward.1} parent=5 // pred_region
      %s1584 = ssub.s32 %s16, 2
      // Predicated region
      $region69: #{asm_forward.1} parent=67 // pred_check
        %p1585 = pneg %p270
      $region70: #{asm_forward.1} parent=67 // pred_check_branch
        %1587 = sbr.rel (%p1585) target = $region72
      $region71: #{asm_forward.1} parent=67 // pred_region
        %p1588 = scmp.lt.s32.totalorder %s22, 1
        %s1589 = scalar_select %p1588, %s22, 1
        %s1590 = smul.addr %s1589, 12
        %s1591 = smul.addr %s1590, 8
        %s1592 = scalar_lea.vmem %s10, %s1591
      $region72: #{asm_forward.1} parent=67 // pred_fallthru
        _
    $region68: #{asm_forward.1} parent=5 // pred_fallthru
      _
  $region6: #{asm_forward.1} parent=0 // loop_footer
    %s20 = sadd.s32 1, %s16
  $region7: #{asm_forward.1} parent=0 // loop_footer_branch
    %15 = sbr.rel target = $region3
  $region8: #{asm_forward.1} parent=0 // loop_exit
    _

</llo_original>
